<compile_context>
chip_gen: v6e
topology: v6e:2x2x1
jax: 0.10.0
libtpu: 0.0.40
codegen_flags: <defaults>
</compile_context>

<pallas_src>
import functools
import math

import jax
import jax.numpy as jnp
import numpy as np
from jax import lax
from jax.experimental import pallas as pl
from jax.experimental.pallas import tpu as pltpu

RMS_EPS = 1.1920928955078125e-07  # torch.finfo(torch.float32).eps (nn.RMSNorm default)


def _rmsnorm_f32(v, g):
    ms = jnp.mean(v * v, axis=-1, keepdims=True)
    return v * lax.rsqrt(ms + RMS_EPS) * g


# --------------------------------------------------------------------------
# Small capability / budget helpers
# --------------------------------------------------------------------------
@functools.lru_cache(maxsize=None)
def _single_buffer_ok() -> bool:
    """Probe whether pipeline_mode=pl.Buffered(1) is accepted by this JAX."""
    def body(x_ref, o_ref):
        o_ref[...] = x_ref[...] + 1.0
    try:
        fn = pl.pallas_call(
            body,
            out_shape=jax.ShapeDtypeStruct((8, 128), jnp.float32),
            grid=(1,),
            in_specs=[pl.BlockSpec((8, 128), lambda i: (0, 0),
                                   pipeline_mode=pl.Buffered(1))],
            out_specs=pl.BlockSpec((8, 128), lambda i: (0, 0)),
        )
        jax.block_until_ready(fn(jnp.zeros((8, 128), jnp.float32)))
        return True
    except Exception:
        return False


def _const_spec(shape):
    """BlockSpec for a weight whose block index never changes (single buffer)."""
    idx = lambda *_: (0,) * len(shape)
    if _single_buffer_ok():
        return pl.BlockSpec(shape, idx, pipeline_mode=pl.Buffered(1))
    return pl.BlockSpec(shape, idx)


def _vmem_limit_bytes() -> int:
    """Per-generation scoped-VMEM budget (~100 MiB on v5e/v6e, ~56 MiB on v7x)."""
    try:
        cap = int(pltpu.get_tpu_info().vmem_capacity_bytes)
    except Exception:
        cap = 128 * 1024 * 1024
    return int(max(32 * 1024 * 1024, min(cap - 8 * 1024 * 1024, 100 * 1024 * 1024)))


# --------------------------------------------------------------------------
# Kernel 1: RMSNorm + fused QKV projection (per (batch, seq-tile)).
#   outputs: Q head-major bf16 (pre-scaled by 1/sqrt(hd)),
#            K/V head-major bf16 (attention operands),
#            K/V cache in (seq, kv_heads*hd) f32 (PyTorch cache layout).
# --------------------------------------------------------------------------
def _qkv_kernel(x_ref, wqkv_ref, g1_ref,
                q_ref, k_ref, v_ref, kc_ref, vc_ref, *,
                q_heads, kv_heads, head_dim, scale):
    hd = head_dim
    x = x_ref[0]                                                   # (T, D) f32
    h = _rmsnorm_f32(x, g1_ref[...]).astype(jnp.bfloat16)
    qkv = jnp.dot(h, wqkv_ref[...], preferred_element_type=jnp.float32)

    # 1/sqrt(hd) folded into Q (saves a (T,T) multiply per key step later).
    for hh in range(q_heads):
        q_ref[0, hh] = (qkv[:, hh * hd:(hh + 1) * hd] * scale).astype(jnp.bfloat16)
    for g in range(kv_heads):
        k_ref[0, g] = qkv[:, (q_heads + g) * hd:
                          (q_heads + g + 1) * hd].astype(jnp.bfloat16)
        v_ref[0, g] = qkv[:, (q_heads + kv_heads + g) * hd:
                          (q_heads + kv_heads + g + 1) * hd].astype(jnp.bfloat16)
    # KV-cache outputs: lane-contiguous row-major slice of qkv -> caller only
    # needs a free metadata reshape (no post-kernel transpose pass over HBM).
    kc_ref[0] = qkv[:, q_heads * hd:(q_heads + kv_heads) * hd]
    vc_ref[0] = qkv[:, (q_heads + kv_heads) * hd:]


# --------------------------------------------------------------------------
# Kernel 2: flash attention (online softmax over scheduled key tiles) + proj
#           + residual + RMSNorm + SwiGLU + residual.
# grid = (batch, flat_step); flat_step walks only valid (q-tile, key-tile)
# pairs from the scalar-prefetched schedule (no dead steps).
# --------------------------------------------------------------------------
def _attn_ffn_kernel(sched_ref, x_ref, q_ref, k_ref, v_ref,
                     wproj_ref, wfc1_ref, wfc2_ref, g2_ref,
                     out_ref,
                     m_ref, l_ref, acc_ref, att_ref, *,
                     q_heads, kv_heads, head_dim, window_size, tq, tk):
    hd = head_dim
    rep = q_heads // kv_heads
    D = x_ref.shape[2]

    s_idx = pl.program_id(1)
    qt = sched_ref[0, s_idx]
    kt = sched_ref[1, s_idx]
    is_first = sched_ref[2, s_idx] == 1
    is_last = sched_ref[3, s_idx] == 1

    @pl.when(is_first)
    def _init():
        m_ref[...] = jnp.full(m_ref.shape, -1e30, jnp.float32)
        l_ref[...] = jnp.zeros(l_ref.shape, jnp.float32)
        acc_ref[...] = jnp.zeros(acc_ref.shape, jnp.float32)

    # ----- masked distance, hoisted out of the group loop --------------------
    q0 = qt * tq
    k0 = kt * tk
    rows = q0 + lax.broadcasted_iota(jnp.int32, (tq, tk), 0)
    cols = k0 + lax.broadcasted_iota(jnp.int32, (tq, tk), 1)
    dist = rows - cols
    mask = dist >= 0
    if window_size != -1:
        mask = jnp.logical_and(mask, dist <= window_size)
    # masked positions -> +inf distance -> score == -inf (safe with m init -1e30).
    dist_m = jnp.where(mask, dist.astype(jnp.float32), jnp.inf)       # (tq, tk)

    # ----- one batched matmul per KV group (rep query heads stacked on M) ----
    # TODO(synk): switch this to lax.fori_loop when kv_heads is large.
    for g in range(kv_heads):
        qg = q_ref[0, g * rep:(g + 1) * rep].reshape(rep * tq, hd)     # bf16
        kg = k_ref[0, g]                                               # (tk, hd) bf16
        vg = v_ref[0, g]                                               # (tk, hd) bf16

        # Q @ K^T without materializing a transposed copy.
        sc = lax.dot_general(qg, kg, (((1,), (1,)), ((), ())),
                             preferred_element_type=jnp.float32)       # (rep*tq, tk)
        sc = sc.reshape(rep, tq, tk)

        # ALiBi slopes built from iota (no captured constants).
        r = lax.broadcasted_iota(jnp.float32, (rep, 1, 1), 0)
        slopes = jnp.exp((g * rep + 1.0 + r) * (-8.0 * math.log(2.0) / q_heads))
        sc = sc - slopes * dist_m[None]                                # bias + mask

        m_prev = m_ref[g]                                              # (rep, tq, 1)
        m_new = jnp.maximum(m_prev, jnp.max(sc, axis=-1, keepdims=True))
        alpha = jnp.exp(m_prev - m_new)
        p = jnp.exp(sc - m_new)                                        # f32
        l_ref[g] = alpha * l_ref[g] + jnp.sum(p, axis=-1, keepdims=True)
        pv = jnp.dot(p.reshape(rep * tq, tk).astype(jnp.bfloat16), vg,
                     preferred_element_type=jnp.float32)               # (rep*tq, hd)
        acc_ref[g] = alpha * acc_ref[g] + pv.reshape(rep, tq, hd)
        m_ref[g] = m_new

    # ----- epilogue: proj + residual + RMSNorm + SwiGLU + residual -----------
    @pl.when(is_last)
    def _epilogue():
        inv_l = pl.reciprocal(l_ref[...], approx=True)     # (KVh, rep, tq, 1)
        # Assemble the attention output slab in bf16 at static column slices.
        for h in range(q_heads):
            gg, rr = divmod(h, rep)
            att_ref[:, h * hd:(h + 1) * hd] = (
                acc_ref[gg, rr] * inv_l[gg, rr]).astype(jnp.bfloat16)
        att = att_ref[...]                                 # (tq, Qh*hd) bf16

        x = x_ref[0]                                       # (tq, D) f32
        y = x + jnp.dot(att, wproj_ref[...], preferred_element_type=jnp.float32)

        # SwiGLU branch (element-wise math in f32, bf16 only into the MXU).
        h2 = _rmsnorm_f32(y, g2_ref[...]).astype(jnp.bfloat16)
        f = jnp.dot(h2, wfc1_ref[...], preferred_element_type=jnp.float32)  # (tq, 2D)
        xv = f[:, :D]
        gate = f[:, D:]
        z = (xv * gate * jax.nn.sigmoid(gate)).astype(jnp.bfloat16)
        out_ref[0] = y + jnp.dot(z, wfc2_ref[...], preferred_element_type=jnp.float32)


# --------------------------------------------------------------------------
# Wrapper
# --------------------------------------------------------------------------
def block_forward(x, wqkv, wproj, wfc1, wfc2, g1, g2, *,
                  q_heads, kv_heads, window_size, q_block=128, k_block=256):
    B, S, D = x.shape
    hd = D // q_heads
    rep = q_heads // kv_heads
    assert q_heads * hd == D and q_heads % kv_heads == 0
    tq = min(q_block, S)
    tk = min(k_block, S)
    assert S % tq == 0 and S % tk == 0 and tq % 8 == 0 and tk % 8 == 0
    nq = S // tq
    nk = S // tk
    cache_len = S if window_size == -1 else min(window_size, S)
    scale = 1.0 / math.sqrt(hd)
    qkv_width = (q_heads + 2 * kv_heads) * hd
    vmem_limit = _vmem_limit_bytes()

    # bf16 operands for the MXU; accumulation is f32 inside the kernels.
    wqkv_b = wqkv.astype(jnp.bfloat16)
    wproj_b = wproj.astype(jnp.bfloat16)
    wfc1_b = wfc1.astype(jnp.bfloat16)
    wfc2_b = wfc2.astype(jnp.bfloat16)

    # ---- kernel 1: RMSNorm + QKV projection -------------------------------
    qkv_kernel = functools.partial(
        _qkv_kernel, q_heads=q_heads, kv_heads=kv_heads, head_dim=hd, scale=scale)
    q_hm, k_att, v_att, kc_flat, vc_flat = pl.pallas_call(
        qkv_kernel,
        out_shape=(
            jax.ShapeDtypeStruct((B, q_heads, S, hd), jnp.bfloat16),
            jax.ShapeDtypeStruct((B, kv_heads, S, hd), jnp.bfloat16),
            jax.ShapeDtypeStruct((B, kv_heads, S, hd), jnp.bfloat16),
            jax.ShapeDtypeStruct((B, S, kv_heads * hd), jnp.float32),
            jax.ShapeDtypeStruct((B, S, kv_heads * hd), jnp.float32),
        ),
        grid_spec=pltpu.PrefetchScalarGridSpec(
            num_scalar_prefetch=0,
            grid=(B, nq),
            in_specs=[
                pl.BlockSpec((1, tq, D), lambda b, i: (b, i, 0)),
                _const_spec((D, qkv_width)),
                _const_spec((1, D)),
            ],
            out_specs=(
                pl.BlockSpec((1, q_heads, tq, hd), lambda b, i: (b, 0, i, 0)),
                pl.BlockSpec((1, kv_heads, tq, hd), lambda b, i: (b, 0, i, 0)),
                pl.BlockSpec((1, kv_heads, tq, hd), lambda b, i: (b, 0, i, 0)),
                pl.BlockSpec((1, tq, kv_heads * hd), lambda b, i: (b, i, 0)),
                pl.BlockSpec((1, tq, kv_heads * hd), lambda b, i: (b, i, 0)),
            ),
        ),
        compiler_params=pltpu.CompilerParams(
            dimension_semantics=("parallel", "parallel"),
            vmem_limit_bytes=vmem_limit),
    )(x, wqkv_b, g1)

    # ---- schedule: only valid (q-tile, key-tile) pairs (no dead grid steps)
    steps = []
    for qt in range(nq):
        q0 = qt * tq
        kt_hi = min(nk - 1, (q0 + tq - 1) // tk)
        kt_lo = 0 if window_size == -1 else max(0, (q0 - window_size) // tk)
        for kt in range(kt_lo, kt_hi + 1):
            steps.append((qt, kt, int(kt == kt_lo), int(kt == kt_hi)))
    sched = jnp.asarray(np.asarray(steps, dtype=np.int32).T)        # (4, total)
    total = len(steps)

    # ---- kernel 2: flash attention + proj + residuals + SwiGLU ------------
    attn_kernel = functools.partial(
        _attn_ffn_kernel, q_heads=q_heads, kv_heads=kv_heads, head_dim=hd,
        window_size=window_size, tq=tq, tk=tk)

    out = pl.pallas_call(
        attn_kernel,
        out_shape=jax.ShapeDtypeStruct((B, S, D), jnp.float32),
        grid_spec=pltpu.PrefetchScalarGridSpec(
            num_scalar_prefetch=1,
            grid=(B, total),
            in_specs=[
                pl.BlockSpec((1, tq, D),
                             lambda b, s, sref: (b, sref[0, s], 0)),
                pl.BlockSpec((1, q_heads, tq, hd),
                             lambda b, s, sref: (b, 0, sref[0, s], 0)),
                pl.BlockSpec((1, kv_heads, tk, hd),
                             lambda b, s, sref: (b, 0, sref[1, s], 0)),
                pl.BlockSpec((1, kv_heads, tk, hd),
                             lambda b, s, sref: (b, 0, sref[1, s], 0)),
                _const_spec((q_heads * hd, D)),
                _const_spec((D, 2 * D)),
                _const_spec((D, D)),
                _const_spec((1, D)),
            ],
            out_specs=pl.BlockSpec((1, tq, D),
                                   lambda b, s, sref: (b, sref[0, s], 0)),
            scratch_shapes=[
                pltpu.VMEM((kv_heads, rep, tq, 1), jnp.float32),     # running max
                pltpu.VMEM((kv_heads, rep, tq, 1), jnp.float32),     # running sum
                pltpu.VMEM((kv_heads, rep, tq, hd), jnp.float32),    # acc
                pltpu.VMEM((tq, q_heads * hd), jnp.bfloat16),        # att slab
            ],
        ),
        compiler_params=pltpu.CompilerParams(
            dimension_semantics=("parallel", "arbitrary"),
            vmem_limit_bytes=vmem_limit),
    )(sched, x, q_hm, k_att, v_att, wproj_b, wfc1_b, wfc2_b, g2)

    # next_kv_cache: (B, cache_len, kv_heads, hd) — metadata reshape + window slice.
    k_cache = kc_flat.reshape(B, S, kv_heads, hd)[:, S - cache_len:]
    v_cache = vc_flat.reshape(B, S, kv_heads, hd)[:, S - cache_len:]
    return out, (k_cache, v_cache)


# --------------------------------------------------------------------------
# Pure-JAX f32 reference (mirrors the PyTorch forward) for verification.
# --------------------------------------------------------------------------
def reference_block(x, wqkv, wproj, wfc1, wfc2, g1, g2, *,
                    q_heads, kv_heads, window_size):
    B, S, D = x.shape
    hd = D // q_heads
    hi = jax.lax.Precision.HIGHEST

    def rmsnorm(v, g):
        return v * jax.lax.rsqrt(jnp.mean(v * v, -1, keepdims=True) + RMS_EPS) * g

    h = rmsnorm(x, g1)
    qkv = jnp.einsum('bsd,de->bse', h, wqkv, precision=hi)
    qkv = qkv.reshape(B, S, q_heads + 2 * kv_heads, hd)
    q = qkv[:, :, :q_heads]
    k = qkv[:, :, q_heads:q_heads + kv_heads]
    v = qkv[:, :, q_heads + kv_heads:]
    rep = q_heads // kv_heads
    k_r = jnp.repeat(k, rep, axis=2)
    v_r = jnp.repeat(v, rep, axis=2)

    s = jnp.einsum('bihd,bjhd->bhij', q, k_r, precision=hi) * (hd ** -0.5)
    slopes = jnp.array([2.0 ** (-(hh + 1) * 8.0 / q_heads) for hh in range(q_heads)],
                       jnp.float32)
    i = jnp.arange(S)[:, None]
    j = jnp.arange(S)[None, :]
    dist = (i - j).astype(jnp.float32)
    s = s - slopes[None, :, None, None] * dist[None, None]
    mask = j <= i
    if window_size != -1:
        mask = mask & (j >= i - window_size)
    s = jnp.where(mask[None, None], s, jnp.float32(-1e30))
    p = jax.nn.softmax(s, -1)
    att = jnp.einsum('bhij,bjhd->bihd', p, v_r, precision=hi).reshape(B, S, q_heads * hd)
    y = x + jnp.einsum('bse,ed->bsd', att, wproj, precision=hi)

    h2 = rmsnorm(y, g2)
    f = jnp.einsum('bsd,de->bse', h2, wfc1, precision=hi)
    xv, gate = f[..., :D], f[..., D:]
    z = jax.nn.silu(gate) * xv
    out = y + jnp.einsum('bsd,de->bse', z, wfc2, precision=hi)

    cache_len = S if window_size == -1 else min(window_size, S)
    return out, (k[:, S - cache_len:], v[:, S - cache_len:])


if __name__ == "__main__":
    B, D, Q_HEADS, KV_HEADS = 2, 128, 4, 2
    hd = D // Q_HEADS

    key = jax.random.PRNGKey(0)
    k0, k1, k2, k3, k4 = jax.random.split(key, 5)
    wqkv = jax.random.normal(k1, (D, (Q_HEADS + 2 * KV_HEADS) * hd), jnp.float32) * 0.02
    wproj = jax.random.normal(k2, (Q_HEADS * hd, D), jnp.float32) * 0.02
    wfc1 = jax.random.normal(k3, (D, 2 * D), jnp.float32) * 0.02
    wfc2 = jax.random.normal(k4, (D, D), jnp.float32) * 0.02
    g1 = jnp.ones((1, D), jnp.float32)   # nn.RMSNorm default weight init (ones)
    g2 = jnp.ones((1, D), jnp.float32)

    # (S, window, key-block): sliding window w/ 256-wide key tile;
    # full causal with multi-step online softmax; small single-tile causal.
    configs = [(256, 64, 256), (256, -1, 128), (128, -1, 128)]
    for S, WINDOW, KBLK in configs:
        x = jax.random.normal(k0, (B, S, D), jnp.float32)

        out, (kc, vc) = block_forward(
            x, wqkv, wproj, wfc1, wfc2, g1, g2,
            q_heads=Q_HEADS, kv_heads=KV_HEADS, window_size=WINDOW,
            q_block=128, k_block=KBLK)
        jax.block_until_ready(out)
        jax.block_until_ready(kc)
        jax.block_until_ready(vc)

        ref_out, (ref_k, ref_v) = reference_block(
            x, wqkv, wproj, wfc1, wfc2, g1, g2,
            q_heads=Q_HEADS, kv_heads=KV_HEADS, window_size=WINDOW)

        cache_len = S if WINDOW == -1 else min(WINDOW, S)
        assert out.shape == (B, S, D)
        assert kc.shape == (B, cache_len, KV_HEADS, hd)
        assert vc.shape == (B, cache_len, KV_HEADS, hd)
        assert bool(jnp.all(jnp.isfinite(out)))
        # bf16 MXU operands (f32 accumulation) vs. an f32 HIGHEST-precision reference.
        assert bool(jnp.allclose(out, ref_out, atol=1e-2, rtol=1e-2))
        assert bool(jnp.allclose(kc, ref_k, atol=1e-2, rtol=1e-2))
        assert bool(jnp.allclose(vc, ref_v, atol=1e-2, rtol=1e-2))

    print("KERNEL_OK")
</pallas_src>

<mosaic_0001>
module attributes {stable_mosaic.version = 11 : i64} {
  func.func @body(%arg0: i32, %arg1: memref<8x128xf32, #tpu.memory_space<vmem>>, %arg2: memref<8x128xf32, #tpu.memory_space<vmem>>) attributes {dimension_semantics = [#tpu.dimension_semantics<arbitrary>], iteration_bounds = array<i64: 1>, scalar_prefetch = 0 : i64, scratch_operands = 0 : i64, tpu.core_type = #tpu.core_type<tc>, window_params = [{pipeline_mode = #tpu.pipeline_mode<synchronous>, transform_indices = @transform_0, window_bounds = array<i64: 8, 128>}, {pipeline_mode = #tpu.pipeline_mode<synchronous>, transform_indices = @transform_1, window_bounds = array<i64: 8, 128>}]} {
    %c0 = arith.constant 0 : index
    %c0_0 = arith.constant 0 : index
    %0 = vector.load %arg1[%c0, %c0_0] : memref<8x128xf32, #tpu.memory_space<vmem>>, vector<8x128xf32>
    %cst = arith.constant 1.000000e+00 : f32
    %1 = vector.broadcast %cst : f32 to vector<8x128xf32>
    %2 = arith.addf %0, %1 : vector<8x128xf32>
    %c0_1 = arith.constant 0 : index
    %c0_2 = arith.constant 0 : index
    %3 = vector.load %arg2[%c0_1, %c0_2] : memref<8x128xf32, #tpu.memory_space<vmem>>, vector<8x128xf32>
    tpu.vector_store %arg2[%c0_1, %c0_2], %2 {strides = array<i32>} : memref<8x128xf32, #tpu.memory_space<vmem>>, vector<8x128xf32>,
    return
  }
  func.func @transform_0(%arg0: i32) -> (i32, i32) {
    %c0_i32 = arith.constant 0 : i32
    %c0_i32_0 = arith.constant 0 : i32
    %c0_i32_1 = arith.constant 0 : i32
    return %c0_i32, %c0_i32_0 : i32, i32
  }
  func.func @transform_1(%arg0: i32) -> (i32, i32) {
    %c0_i32 = arith.constant 0 : i32
    %c0_i32_0 = arith.constant 0 : i32
    %c0_i32_1 = arith.constant 0 : i32
    return %c0_i32, %c0_i32_0 : i32, i32
  }
}

module attributes {stable_mosaic.version = 11 : i64} {
  func.func @_qkv_kernel(%arg0: i32, %arg1: i32, %arg2: memref<1x128x128xf32, #tpu.memory_space<vmem>>, %arg3: memref<128x256xbf16, #tpu.memory_space<vmem>>, %arg4: memref<1x128xf32, #tpu.memory_space<vmem>>, %arg5: memref<1x4x128x32xbf16, #tpu.memory_space<vmem>>, %arg6: memref<1x2x128x32xbf16, #tpu.memory_space<vmem>>, %arg7: memref<1x2x128x32xbf16, #tpu.memory_space<vmem>>, %arg8: memref<1x128x64xf32, #tpu.memory_space<vmem>>, %arg9: memref<1x128x64xf32, #tpu.memory_space<vmem>>) attributes {dimension_semantics = [#tpu.dimension_semantics<parallel>, #tpu.dimension_semantics<parallel>], iteration_bounds = array<i64: 2, 2>, scalar_prefetch = 0 : i64, scratch_operands = 0 : i64, tpu.core_type = #tpu.core_type<tc>, window_params = [{transform_indices = @transform_0, window_bounds = array<i64: 1, 128, 128>}, {pipeline_mode = #tpu.pipeline_mode<synchronous>, transform_indices = @transform_1, window_bounds = array<i64: 128, 256>}, {pipeline_mode = #tpu.pipeline_mode<synchronous>, transform_indices = @transform_2, window_bounds = array<i64: 1, 128>}, {transform_indices = @transform_3, window_bounds = array<i64: 1, 4, 128, 32>}, {transform_indices = @transform_4, window_bounds = array<i64: 1, 2, 128, 32>}, {transform_indices = @transform_5, window_bounds = array<i64: 1, 2, 128, 32>}, {transform_indices = @transform_6, window_bounds = array<i64: 1, 128, 64>}, {transform_indices = @transform_7, window_bounds = array<i64: 1, 128, 64>}]} {
    %c0 = arith.constant 0 : index
    %c0_0 = arith.constant 0 : index
    %c0_1 = arith.constant 0 : index
    %0 = vector.load %arg2[%c0, %c0_0, %c0_1] : memref<1x128x128xf32, #tpu.memory_space<vmem>>, vector<1x128x128xf32>
    %1 = vector.shape_cast %0 : vector<1x128x128xf32> to vector<128x128xf32>
    %c0_2 = arith.constant 0 : index
    %c0_3 = arith.constant 0 : index
    %2 = vector.load %arg4[%c0_2, %c0_3] : memref<1x128xf32, #tpu.memory_space<vmem>>, vector<1x128xf32>
    %3 = arith.mulf %1, %1 : vector<128x128xf32>
    %cst = arith.constant dense<0.000000e+00> : vector<128xf32>
    %4 = vector.multi_reduction <add>, %3, %cst [1] : vector<128x128xf32> to vector<128xf32>
    %5 = vector.shape_cast %4 : vector<128xf32> to vector<128x1xf32>
    %cst_4 = arith.constant 1.280000e+02 : f32
    %6 = vector.broadcast %cst_4 : f32 to vector<128x1xf32>
    %7 = arith.divf %5, %6 : vector<128x1xf32>
    %cst_5 = arith.constant 1.1920929E-7 : f32
    %8 = vector.broadcast %cst_5 : f32 to vector<128x1xf32>
    %9 = arith.addf %7, %8 : vector<128x1xf32>
    %10 = math.rsqrt %9 : vector<128x1xf32>
    %11 = vector.broadcast %10 : vector<128x1xf32> to vector<128x128xf32>
    %12 = arith.mulf %1, %11 : vector<128x128xf32>
    %13 = vector.broadcast %2 : vector<1x128xf32> to vector<128x128xf32>
    %14 = arith.mulf %12, %13 : vector<128x128xf32>
    %15 = arith.truncf %14 : vector<128x128xf32> to vector<128x128xbf16>
    %c0_6 = arith.constant 0 : index
    %c0_7 = arith.constant 0 : index
    %16 = vector.load %arg3[%c0_6, %c0_7] : memref<128x256xbf16, #tpu.memory_space<vmem>>, vector<128x256xbf16>
    %cst_8 = arith.constant dense<0.000000e+00> : vector<128x256xf32>
    %17 = tpu.matmul %15, %16, %cst_8 {dimension_numbers = #tpu.dot_dimension_numbers<[1], [0], [0], [1], [0, 0, 1, 1], [], []>} : vector<128x128xbf16>, vector<128x256xbf16>, vector<128x256xf32> -> vector<128x256xf32>
    %18 = vector.extract_strided_slice %17 {offsets = [0, 0], sizes = [128, 32], strides = [1, 1]} : vector<128x256xf32> to vector<128x32xf32>
    %cst_9 = arith.constant 0.176776692 : f32
    %19 = vector.broadcast %cst_9 : f32 to vector<128x32xf32>
    %20 = arith.mulf %18, %19 : vector<128x32xf32>
    %21 = arith.truncf %20 : vector<128x32xf32> to vector<128x32xbf16>
    %c0_10 = arith.constant 0 : index
    %c0_11 = arith.constant 0 : index
    %c0_12 = arith.constant 0 : index
    %c0_13 = arith.constant 0 : index
    %22 = vector.load %arg5[%c0_10, %c0_11, %c0_12, %c0_13] : memref<1x4x128x32xbf16, #tpu.memory_space<vmem>>, vector<1x1x128x32xbf16>
    %23 = vector.shape_cast %22 : vector<1x1x128x32xbf16> to vector<128x32xbf16>
    %24 = vector.shape_cast %21 : vector<128x32xbf16> to vector<1x1x128x32xbf16>
    tpu.vector_store %arg5[%c0_10, %c0_11, %c0_12, %c0_13], %24 {strides = array<i32>} : memref<1x4x128x32xbf16, #tpu.memory_space<vmem>>, vector<1x1x128x32xbf16>,
    %25 = vector.extract_strided_slice %17 {offsets = [0, 32], sizes = [128, 32], strides = [1, 1]} : vector<128x256xf32> to vector<128x32xf32>
    %cst_14 = arith.constant 0.176776692 : f32
    %26 = vector.broadcast %cst_14 : f32 to vector<128x32xf32>
    %27 = arith.mulf %25, %26 : vector<128x32xf32>
    %28 = arith.truncf %27 : vector<128x32xf32> to vector<128x32xbf16>
    %c0_15 = arith.constant 0 : index
    %c1 = arith.constant 1 : index
    %c0_16 = arith.constant 0 : index
    %c0_17 = arith.constant 0 : index
    %29 = vector.load %arg5[%c0_15, %c1, %c0_16, %c0_17] : memref<1x4x128x32xbf16, #tpu.memory_space<vmem>>, vector<1x1x128x32xbf16>
    %30 = vector.shape_cast %29 : vector<1x1x128x32xbf16> to vector<128x32xbf16>
    %31 = vector.shape_cast %28 : vector<128x32xbf16> to vector<1x1x128x32xbf16>
    tpu.vector_store %arg5[%c0_15, %c1, %c0_16, %c0_17], %31 {strides = array<i32>} : memref<1x4x128x32xbf16, #tpu.memory_space<vmem>>, vector<1x1x128x32xbf16>,
    %32 = vector.extract_strided_slice %17 {offsets = [0, 64], sizes = [128, 32], strides = [1, 1]} : vector<128x256xf32> to vector<128x32xf32>
    %cst_18 = arith.constant 0.176776692 : f32
    %33 = vector.broadcast %cst_18 : f32 to vector<128x32xf32>
    %34 = arith.mulf %32, %33 : vector<128x32xf32>
    %35 = arith.truncf %34 : vector<128x32xf32> to vector<128x32xbf16>
    %c0_19 = arith.constant 0 : index
    %c2 = arith.constant 2 : index
    %c0_20 = arith.constant 0 : index
    %c0_21 = arith.constant 0 : index
    %36 = vector.load %arg5[%c0_19, %c2, %c0_20, %c0_21] : memref<1x4x128x32xbf16, #tpu.memory_space<vmem>>, vector<1x1x128x32xbf16>
    %37 = vector.shape_cast %36 : vector<1x1x128x32xbf16> to vector<128x32xbf16>
    %38 = vector.shape_cast %35 : vector<128x32xbf16> to vector<1x1x128x32xbf16>
    tpu.vector_store %arg5[%c0_19, %c2, %c0_20, %c0_21], %38 {strides = array<i32>} : memref<1x4x128x32xbf16, #tpu.memory_space<vmem>>, vector<1x1x128x32xbf16>,
    %39 = vector.extract_strided_slice %17 {offsets = [0, 96], sizes = [128, 32], strides = [1, 1]} : vector<128x256xf32> to vector<128x32xf32>
    %cst_22 = arith.constant 0.176776692 : f32
    %40 = vector.broadcast %cst_22 : f32 to vector<128x32xf32>
    %41 = arith.mulf %39, %40 : vector<128x32xf32>
    %42 = arith.truncf %41 : vector<128x32xf32> to vector<128x32xbf16>
    %c0_23 = arith.constant 0 : index
    %c3 = arith.constant 3 : index
    %c0_24 = arith.constant 0 : index
    %c0_25 = arith.constant 0 : index
    %43 = vector.load %arg5[%c0_23, %c3, %c0_24, %c0_25] : memref<1x4x128x32xbf16, #tpu.memory_space<vmem>>, vector<1x1x128x32xbf16>
    %44 = vector.shape_cast %43 : vector<1x1x128x32xbf16> to vector<128x32xbf16>
    %45 = vector.shape_cast %42 : vector<128x32xbf16> to vector<1x1x128x32xbf16>
    tpu.vector_store %arg5[%c0_23, %c3, %c0_24, %c0_25], %45 {strides = array<i32>} : memref<1x4x128x32xbf16, #tpu.memory_space<vmem>>, vector<1x1x128x32xbf16>,
    %46 = vector.extract_strided_slice %17 {offsets = [0, 128], sizes = [128, 32], strides = [1, 1]} : vector<128x256xf32> to vector<128x32xf32>
    %47 = arith.truncf %46 : vector<128x32xf32> to vector<128x32xbf16>
    %c0_26 = arith.constant 0 : index
    %c0_27 = arith.constant 0 : index
    %c0_28 = arith.constant 0 : index
    %c0_29 = arith.constant 0 : index
    %48 = vector.load %arg6[%c0_26, %c0_27, %c0_28, %c0_29] : memref<1x2x128x32xbf16, #tpu.memory_space<vmem>>, vector<1x1x128x32xbf16>
    %49 = vector.shape_cast %48 : vector<1x1x128x32xbf16> to vector<128x32xbf16>
    %50 = vector.shape_cast %47 : vector<128x32xbf16> to vector<1x1x128x32xbf16>
    tpu.vector_store %arg6[%c0_26, %c0_27, %c0_28, %c0_29], %50 {strides = array<i32>} : memref<1x2x128x32xbf16, #tpu.memory_space<vmem>>, vector<1x1x128x32xbf16>,
    %51 = vector.extract_strided_slice %17 {offsets = [0, 192], sizes = [128, 32], strides = [1, 1]} : vector<128x256xf32> to vector<128x32xf32>
    %52 = arith.truncf %51 : vector<128x32xf32> to vector<128x32xbf16>
    %c0_30 = arith.constant 0 : index
    %c0_31 = arith.constant 0 : index
    %c0_32 = arith.constant 0 : index
    %c0_33 = arith.constant 0 : index
    %53 = vector.load %arg7[%c0_30, %c0_31, %c0_32, %c0_33] : memref<1x2x128x32xbf16, #tpu.memory_space<vmem>>, vector<1x1x128x32xbf16>
    %54 = vector.shape_cast %53 : vector<1x1x128x32xbf16> to vector<128x32xbf16>
    %55 = vector.shape_cast %52 : vector<128x32xbf16> to vector<1x1x128x32xbf16>
    tpu.vector_store %arg7[%c0_30, %c0_31, %c0_32, %c0_33], %55 {strides = array<i32>} : memref<1x2x128x32xbf16, #tpu.memory_space<vmem>>, vector<1x1x128x32xbf16>,
    %56 = vector.extract_strided_slice %17 {offsets = [0, 160], sizes = [128, 32], strides = [1, 1]} : vector<128x256xf32> to vector<128x32xf32>
    %57 = arith.truncf %56 : vector<128x32xf32> to vector<128x32xbf16>
    %c0_34 = arith.constant 0 : index
    %c1_35 = arith.constant 1 : index
    %c0_36 = arith.constant 0 : index
    %c0_37 = arith.constant 0 : index
    %58 = vector.load %arg6[%c0_34, %c1_35, %c0_36, %c0_37] : memref<1x2x128x32xbf16, #tpu.memory_space<vmem>>, vector<1x1x128x32xbf16>
    %59 = vector.shape_cast %58 : vector<1x1x128x32xbf16> to vector<128x32xbf16>
    %60 = vector.shape_cast %57 : vector<128x32xbf16> to vector<1x1x128x32xbf16>
    tpu.vector_store %arg6[%c0_34, %c1_35, %c0_36, %c0_37], %60 {strides = array<i32>} : memref<1x2x128x32xbf16, #tpu.memory_space<vmem>>, vector<1x1x128x32xbf16>,
    %61 = vector.extract_strided_slice %17 {offsets = [0, 224], sizes = [128, 32], strides = [1, 1]} : vector<128x256xf32> to vector<128x32xf32>
    %62 = arith.truncf %61 : vector<128x32xf32> to vector<128x32xbf16>
    %c0_38 = arith.constant 0 : index
    %c1_39 = arith.constant 1 : index
    %c0_40 = arith.constant 0 : index
    %c0_41 = arith.constant 0 : index
    %63 = vector.load %arg7[%c0_38, %c1_39, %c0_40, %c0_41] : memref<1x2x128x32xbf16, #tpu.memory_space<vmem>>, vector<1x1x128x32xbf16>
    %64 = vector.shape_cast %63 : vector<1x1x128x32xbf16> to vector<128x32xbf16>
    %65 = vector.shape_cast %62 : vector<128x32xbf16> to vector<1x1x128x32xbf16>
    tpu.vector_store %arg7[%c0_38, %c1_39, %c0_40, %c0_41], %65 {strides = array<i32>} : memref<1x2x128x32xbf16, #tpu.memory_space<vmem>>, vector<1x1x128x32xbf16>,
    %66 = vector.extract_strided_slice %17 {offsets = [0, 128], sizes = [128, 64], strides = [1, 1]} : vector<128x256xf32> to vector<128x64xf32>
    %c0_42 = arith.constant 0 : index
    %c0_43 = arith.constant 0 : index
    %c0_44 = arith.constant 0 : index
    %67 = vector.load %arg8[%c0_42, %c0_43, %c0_44] : memref<1x128x64xf32, #tpu.memory_space<vmem>>, vector<1x128x64xf32>
    %68 = vector.shape_cast %67 : vector<1x128x64xf32> to vector<128x64xf32>
    %69 = vector.shape_cast %66 : vector<128x64xf32> to vector<1x128x64xf32>
    tpu.vector_store %arg8[%c0_42, %c0_43, %c0_44], %69 {strides = array<i32>} : memref<1x128x64xf32, #tpu.memory_space<vmem>>, vector<1x128x64xf32>,
    %70 = vector.extract_strided_slice %17 {offsets = [0, 192], sizes = [128, 64], strides = [1, 1]} : vector<128x256xf32> to vector<128x64xf32>
    %c0_45 = arith.constant 0 : index
    %c0_46 = arith.constant 0 : index
    %c0_47 = arith.constant 0 : index
    %71 = vector.load %arg9[%c0_45, %c0_46, %c0_47] : memref<1x128x64xf32, #tpu.memory_space<vmem>>, vector<1x128x64xf32>
    %72 = vector.shape_cast %71 : vector<1x128x64xf32> to vector<128x64xf32>
    %73 = vector.shape_cast %70 : vector<128x64xf32> to vector<1x128x64xf32>
    tpu.vector_store %arg9[%c0_45, %c0_46, %c0_47], %73 {strides = array<i32>} : memref<1x128x64xf32, #tpu.memory_space<vmem>>, vector<1x128x64xf32>,
    return
  }
  func.func @transform_0(%arg0: i32, %arg1: i32) -> (i32, i32, i32) {
    %c0_i32 = arith.constant 0 : i32
    %c0_i32_0 = arith.constant 0 : i32
    return %arg0, %arg1, %c0_i32 : i32, i32, i32
  }
  func.func @transform_1(%arg0: i32, %arg1: i32) -> (i32, i32) {
    %c0_i32 = arith.constant 0 : i32
    %c0_i32_0 = arith.constant 0 : i32
    %c0_i32_1 = arith.constant 0 : i32
    return %c0_i32, %c0_i32_0 : i32, i32
  }
  func.func @transform_2(%arg0: i32, %arg1: i32) -> (i32, i32) {
    %c0_i32 = arith.constant 0 : i32
    %c0_i32_0 = arith.constant 0 : i32
    %c0_i32_1 = arith.constant 0 : i32
    return %c0_i32, %c0_i32_0 : i32, i32
  }
  func.func @transform_3(%arg0: i32, %arg1: i32) -> (i32, i32, i32, i32) {
    %c0_i32 = arith.constant 0 : i32
    %c0_i32_0 = arith.constant 0 : i32
    %c0_i32_1 = arith.constant 0 : i32
    return %arg0, %c0_i32, %arg1, %c0_i32_0 : i32, i32, i32, i32
  }
  func.func @transform_4(%arg0: i32, %arg1: i32) -> (i32, i32, i32, i32) {
    %c0_i32 = arith.constant 0 : i32
    %c0_i32_0 = arith.constant 0 : i32
    %c0_i32_1 = arith.constant 0 : i32
    return %arg0, %c0_i32, %arg1, %c0_i32_0 : i32, i32, i32, i32
  }
  func.func @transform_5(%arg0: i32, %arg1: i32) -> (i32, i32, i32, i32) {
    %c0_i32 = arith.constant 0 : i32
    %c0_i32_0 = arith.constant 0 : i32
    %c0_i32_1 = arith.constant 0 : i32
    return %arg0, %c0_i32, %arg1, %c0_i32_0 : i32, i32, i32, i32
  }
  func.func @transform_6(%arg0: i32, %arg1: i32) -> (i32, i32, i32) {
    %c0_i32 = arith.constant 0 : i32
    %c0_i32_0 = arith.constant 0 : i32
    return %arg0, %arg1, %c0_i32 : i32, i32, i32
  }
  func.func @transform_7(%arg0: i32, %arg1: i32) -> (i32, i32, i32) {
    %c0_i32 = arith.constant 0 : i32
    %c0_i32_0 = arith.constant 0 : i32
    return %arg0, %arg1, %c0_i32 : i32, i32, i32
  }
}

</mosaic_0001>

<llo_original>
// kernel: tpu_custom_call.1
$region0: #{tpu_custom_call.1}
  #allocation0 [shape = 'u32[]', space=smem, size = 0x4, offset = 0x4, fixed_abs, tag = 'smem constant byte address 0x4 - core index']
  #allocation1 [shape = 'u32[144,128]{1,0:T(1,128)}', space=vmem, size = 0x12000, scoped, tag = 'internal scratch']
  %s0 = inlined_call_operand.hbm [shape: f32[8,128], index: 0, kind: input, shape index: {}]
  %s1 = inlined_call_operand.hbm [shape: f32[8,128], index: 1, kind: output, shape index: {}]
  %s2 = sld [smem:[#allocation0]]
  $region18: #{tpu_custom_call.1} parent=0
    _
  %s4 = ssub.s32 1, %s2
  %s5 = scalar_select 0, %s4, %s2
  $region1: #{tpu_custom_call.1} parent=0
    #allocation2 [shape = 'u8[4096]{0}', space=vmem, size = 0x1000, scoped, tag = 'input window, operand 0, single buffered']
    #allocation3 [shape = 's32[1]{0}', space=sflag, size = 0x4, scoped, tag = 'scoped memory for tpu_custom_call.1']
    #allocation4 [shape = 's32[1]{0}', space=sflag, size = 0x4, scoped, tag = 'scoped memory for tpu_custom_call.1']
    #allocation5 [shape = 'u8[4096]{0}', space=vmem, size = 0x1000, scoped, tag = 'output window, operand 0, single buffered']
    %6 = vsyncpa [#allocation3], 0
    %7 = vsyncpa [#allocation4], 0
    // Predicated region
    $region2: #{tpu_custom_call.1} parent=1 // pred_check
      _
    $region3: #{tpu_custom_call.1} parent=1 // pred_check_branch
      %9 = sbr.rel (0) target = $region5
    $region4: #{tpu_custom_call.1} parent=1 // pred_region
      %s11 = ssub.s32 128, 128
      %12 = vsyncadd [#allocation3], %s11
      %s14 = sshll.u32 [#allocation2], 4
      %s15 = int_to_ptr.vmem [resolvable:$true] %s14
      %17 = dma.hbm_to_vmem [thread:$0]  %s0, 128, %s15, [#allocation3]
    $region5: #{tpu_custom_call.1} parent=1 // pred_fallthru
      _
    // Predicated region
    $region6: #{tpu_custom_call.1} parent=1 // pred_check
      _
    $region7: #{tpu_custom_call.1} parent=1 // pred_check_branch
      %19 = sbr.rel (0) target = $region9
    $region8: #{tpu_custom_call.1} parent=1 // pred_region
      %20 = dma.done [#allocation3], 128
    $region9: #{tpu_custom_call.1} parent=1 // pred_fallthru
      _
    %v21 = vld [vmem:[#allocation2] sm:$0xff]
    %v22 = vadd.f32 %v21, 1.0
    %23 = vst [vmem:[#allocation5] sm:$0xff] %v22
    // Predicated region
    $region10: #{tpu_custom_call.1} parent=1 // pred_check
      _
    $region11: #{tpu_custom_call.1} parent=1 // pred_check_branch
      %25 = sbr.rel (0) target = $region13
    $region12: #{tpu_custom_call.1} parent=1 // pred_region
      %s27 = ssub.s32 128, 128
      %28 = vsyncadd [#allocation4], %s27
      %s30 = sshll.u32 [#allocation5], 4
      %s31 = int_to_ptr.vmem [resolvable:$true] %s30
      %33 = dma.vmem_to_hbm [thread:$0]  %s31, 128, %s1, [#allocation4]
    $region13: #{tpu_custom_call.1} parent=1 // pred_fallthru
      _
    // Predicated region
    $region14: #{tpu_custom_call.1} parent=1 // pred_check
      _
    $region15: #{tpu_custom_call.1} parent=1 // pred_check_branch
      %35 = sbr.rel (0) target = $region17
    $region16: #{tpu_custom_call.1} parent=1 // pred_region
      %36 = dma.done [#allocation4], 128
    $region17: #{tpu_custom_call.1} parent=1 // pred_fallthru
      _
    %37 = vsyncpa [#allocation3], 1
    %38 = vsyncpa [#allocation4], 1

// kernel: tpu_custom_call.1
$region0: #{tpu_custom_call.1}
  #allocation0 [shape = 'u32[]', space=smem, size = 0x4, offset = 0x4, fixed_abs, tag = 'smem constant byte address 0x4 - core index']
  #allocation1 [shape = 'u32[144,128]{1,0:T(1,128)}', space=vmem, size = 0x12000, scoped, tag = 'internal scratch']
  %s0 = inlined_call_operand.hbm [shape: f32[2,256,128], index: 0, kind: input, shape index: {}]
  %s1 = inlined_call_operand.hbm [shape: bf16[128,256], index: 1, kind: input, shape index: {}]
  %s2 = inlined_call_operand.vmem [shape: f32[1,128], index: 2, kind: input, shape index: {}]
  %s3 = inlined_call_operand.vmem [shape: bf16[2,4,256,32], index: 3, kind: output, shape index: {0}]
  %s4 = inlined_call_operand.vmem [shape: bf16[2,2,256,32], index: 4, kind: output, shape index: {1}]
  %s5 = inlined_call_operand.vmem [shape: bf16[2,2,256,32], index: 5, kind: output, shape index: {2}]
  %s6 = inlined_call_operand.vmem [shape: f32[2,256,64], index: 6, kind: output, shape index: {3}]
  %s7 = inlined_call_operand.vmem [shape: f32[2,256,64], index: 7, kind: output, shape index: {4}]
  %8 = xla_tuple %s3, %s4, %s5, %s6, %s7
  %s9 = sld [smem:[#allocation0]]
  $region196: #{tpu_custom_call.1} parent=0
    _
  %s11 = ssub.s32 1, %s9
  %s12 = scalar_select 0, %s11, %s9
  $region1: #{tpu_custom_call.1} parent=0
    #allocation2 [shape = 'u8[131072]{0}', space=vmem, size = 0x20000, scoped, tag = 'input window, operand 0']
    #allocation3 [shape = 's32[2]{0}', space=sflag, size = 0x8, scoped, tag = 'scoped memory for tpu_custom_call.1']
    #allocation4 [shape = 'u8[65536]{0}', space=vmem, size = 0x10000, scoped, tag = 'input window, operand 1, single buffered']
    #allocation5 [shape = 's32[1]{0}', space=sflag, size = 0x4, scoped, tag = 'scoped memory for tpu_custom_call.1']
    #allocation6 [shape = 'u8[262144]{0}', space=vmem, size = 0x40000, scoped, tag = 'output window, operand 0']
    #allocation7 [shape = 'u8[131072]{0}', space=vmem, size = 0x20000, scoped, tag = 'output window, operand 1']
    #allocation8 [shape = 'u8[131072]{0}', space=vmem, size = 0x20000, scoped, tag = 'output window, operand 2']
    %13 = vsyncpa [#allocation3], 0
    %s14 = scalar_lea.sflag [#allocation3], 1
    %15 = vsyncpa %s14, 0
    %16 = vsyncpa [#allocation5], 0
    loop: start=0, step=1, limit=6
    $region2: #{tpu_custom_call.1} parent=1 // loop_pre_header
      _
    $region3: #{tpu_custom_call.1} parent=1 // loop_header
      %s18 = sphi 0, %s22
      %p19 = scmp.ge.s32.totalorder %s18, 6
      %s25 = sphi 0, %s37
      %s26 = sphi 0, %s33
      %s27 = sphi 0, %s25
      %s28 = sphi 0, %s26
      %s29 = sphi 0, %s27
      %s30 = sphi 0, %s28
      %s42 = sphi 0, %s44
      %s45 = sphi 0, %s42
      %s46 = sphi 0, %s45
      %s62 = sphi 0, %s46
      %s66 = sphi 0, %s66
      %s68 = sphi 0, %s66
      %s69 = sphi 0, %s68
      %s83 = sphi 0, %s69
      %s87 = sphi 0, %s87
      %s89 = sphi 0, %s87
      %s90 = sphi 0, %s89
      %s104 = sphi 0, %s90
      %s112 = sphi 0, %s114
      %s115 = sphi 0, %s112
      %s116 = sphi 0, %s115
      %s132 = sphi 0, %s116
      %s140 = sphi 0, %s142
      %s143 = sphi 0, %s140
      %s144 = sphi 0, %s143
      %s160 = sphi 0, %s144
      %s168 = sphi 0, %s170
      %s171 = sphi 0, %s168
      %s172 = sphi 0, %s171
      %s188 = sphi 0, %s172
      %s196 = sphi 0, %s198
      %s199 = sphi 0, %s196
      %s200 = sphi 0, %s199
      %s216 = sphi 0, %s200
      %s224 = sphi 0, %s226
      %s227 = sphi 0, %s224
      %s228 = sphi 0, %s227
      %s244 = sphi 0, %s228
    $region4: #{tpu_custom_call.1} parent=1 // loop_header_branch
      %21 = sbr.rel (%p19) target = $region8
    $region5: #{tpu_custom_call.1} parent=1 // loop_body
      %s23 = ssub.s32 %s18, 1
      %s24 = ssub.s32 %s18, 2
      %s31 = sadd.s32 1, %s26
      %p32 = scmp.ge.s32.totalorder %s31, 2
      %s33 = scalar_select %p32, 0, %s31
      %s34 = sadd.s32 1, %s25
      %s35 = scalar_select %p32, %s34, %s25
      %p36 = scmp.ge.s32.totalorder %s35, 2
      %s37 = scalar_select %p36, 0, %s35
      %s38 = ssub.s32 %s25, %s37
      %s39 = ssub.s32 %s26, %s33
      %s40 = sor.u32 %s38, %s39
      %p41 = scmp.eq.s32.totalorder %s40, 0
      %s43 = sadd.s32 %s42, 1
      %s44 = scalar_select %p41, %s42, %s43
      %p47 = pneg %p41
      %p48 = scmp.eq.s32.totalorder %s18, 3
      %p49 = por %p47, %p48
      %p50 = scmp.ne.s32.totalorder %s42, %s45
      %p51 = scmp.eq.s32.totalorder %s18, 0
      %p52 = por %p50, %p51
      %p53 = scmp.ne.s32.totalorder %s42, %s45
      %p54 = scmp.eq.s32.totalorder %s23, 3
      %p55 = por %p53, %p54
      %p56 = scmp.ne.s32.totalorder %s45, %s46
      %p57 = scmp.eq.s32.totalorder %s23, 0
      %p58 = por %p56, %p57
      %p59 = scmp.ne.s32.totalorder %s45, %s46
      %p60 = scmp.eq.s32.totalorder %s24, 3
      %p61 = por %p59, %p60
      %p63 = scmp.ne.s32.totalorder %s46, %s62
      %p64 = scmp.eq.s32.totalorder %s24, 0
      %p65 = por %p63, %p64
      %s67 = sadd.s32 %s66, 1
      %p70 = scmp.eq.s32.totalorder %s18, 3
      %p71 = scmp.ne.s32.totalorder %s66, %s68
      %p72 = scmp.eq.s32.totalorder %s18, 0
      %p73 = por %p71, %p72
      %p74 = scmp.ne.s32.totalorder %s66, %s68
      %p75 = scmp.eq.s32.totalorder %s23, 3
      %p76 = por %p74, %p75
      %p77 = scmp.ne.s32.totalorder %s68, %s69
      %p78 = scmp.eq.s32.totalorder %s23, 0
      %p79 = por %p77, %p78
      %p80 = scmp.ne.s32.totalorder %s68, %s69
      %p81 = scmp.eq.s32.totalorder %s24, 3
      %p82 = por %p80, %p81
      %p84 = scmp.ne.s32.totalorder %s69, %s83
      %p85 = scmp.eq.s32.totalorder %s24, 0
      %p86 = por %p84, %p85
      %s88 = sadd.s32 %s87, 1
      %p91 = scmp.eq.s32.totalorder %s18, 3
      %p92 = scmp.ne.s32.totalorder %s87, %s89
      %p93 = scmp.eq.s32.totalorder %s18, 0
      %p94 = por %p92, %p93
      %p95 = scmp.ne.s32.totalorder %s87, %s89
      %p96 = scmp.eq.s32.totalorder %s23, 3
      %p97 = por %p95, %p96
      %p98 = scmp.ne.s32.totalorder %s89, %s90
      %p99 = scmp.eq.s32.totalorder %s23, 0
      %p100 = por %p98, %p99
      %p101 = scmp.ne.s32.totalorder %s89, %s90
      %p102 = scmp.eq.s32.totalorder %s24, 3
      %p103 = por %p101, %p102
      %p105 = scmp.ne.s32.totalorder %s90, %s104
      %p106 = scmp.eq.s32.totalorder %s24, 0
      %p107 = por %p105, %p106
      %s108 = ssub.s32 %s25, %s37
      %s109 = ssub.s32 %s26, %s33
      %s110 = sor.u32 %s108, %s109
      %p111 = scmp.eq.s32.totalorder %s110, 0
      %s113 = sadd.s32 %s112, 1
      %s114 = scalar_select %p111, %s112, %s113
      %p117 = pneg %p111
      %p118 = scmp.eq.s32.totalorder %s18, 3
      %p119 = por %p117, %p118
      %p120 = scmp.ne.s32.totalorder %s112, %s115
      %p121 = scmp.eq.s32.totalorder %s18, 0
      %p122 = por %p120, %p121
      %p123 = scmp.ne.s32.totalorder %s112, %s115
      %p124 = scmp.eq.s32.totalorder %s23, 3
      %p125 = por %p123, %p124
      %p126 = scmp.ne.s32.totalorder %s115, %s116
      %p127 = scmp.eq.s32.totalorder %s23, 0
      %p128 = por %p126, %p127
      %p129 = scmp.ne.s32.totalorder %s115, %s116
      %p130 = scmp.eq.s32.totalorder %s24, 3
      %p131 = por %p129, %p130
      %p133 = scmp.ne.s32.totalorder %s116, %s132
      %p134 = scmp.eq.s32.totalorder %s24, 0
      %p135 = por %p133, %p134
      %s136 = ssub.s32 %s25, %s37
      %s137 = ssub.s32 %s26, %s33
      %s138 = sor.u32 %s136, %s137
      %p139 = scmp.eq.s32.totalorder %s138, 0
      %s141 = sadd.s32 %s140, 1
      %s142 = scalar_select %p139, %s140, %s141
      %p145 = pneg %p139
      %p146 = scmp.eq.s32.totalorder %s18, 3
      %p147 = por %p145, %p146
      %p148 = scmp.ne.s32.totalorder %s140, %s143
      %p149 = scmp.eq.s32.totalorder %s18, 0
      %p150 = por %p148, %p149
      %p151 = scmp.ne.s32.totalorder %s140, %s143
      %p152 = scmp.eq.s32.totalorder %s23, 3
      %p153 = por %p151, %p152
      %p154 = scmp.ne.s32.totalorder %s143, %s144
      %p155 = scmp.eq.s32.totalorder %s23, 0
      %p156 = por %p154, %p155
      %p157 = scmp.ne.s32.totalorder %s143, %s144
      %p158 = scmp.eq.s32.totalorder %s24, 3
      %p159 = por %p157, %p158
      %p161 = scmp.ne.s32.totalorder %s144, %s160
      %p162 = scmp.eq.s32.totalorder %s24, 0
      %p163 = por %p161, %p162
      %s164 = ssub.s32 %s25, %s37
      %s165 = ssub.s32 %s26, %s33
      %s166 = sor.u32 %s164, %s165
      %p167 = scmp.eq.s32.totalorder %s166, 0
      %s169 = sadd.s32 %s168, 1
      %s170 = scalar_select %p167, %s168, %s169
      %p173 = pneg %p167
      %p174 = scmp.eq.s32.totalorder %s18, 3
      %p175 = por %p173, %p174
      %p176 = scmp.ne.s32.totalorder %s168, %s171
      %p177 = scmp.eq.s32.totalorder %s18, 0
      %p178 = por %p176, %p177
      %p179 = scmp.ne.s32.totalorder %s168, %s171
      %p180 = scmp.eq.s32.totalorder %s23, 3
      %p181 = por %p179, %p180
      %p182 = scmp.ne.s32.totalorder %s171, %s172
      %p183 = scmp.eq.s32.totalorder %s23, 0
      %p184 = por %p182, %p183
      %p185 = scmp.ne.s32.totalorder %s171, %s172
      %p186 = scmp.eq.s32.totalorder %s24, 3
      %p187 = por %p185, %p186
      %p189 = scmp.ne.s32.totalorder %s172, %s188
      %p190 = scmp.eq.s32.totalorder %s24, 0
      %p191 = por %p189, %p190
      %s192 = ssub.s32 %s25, %s37
      %s193 = ssub.s32 %s26, %s33
      %s194 = sor.u32 %s192, %s193
      %p195 = scmp.eq.s32.totalorder %s194, 0
      %s197 = sadd.s32 %s196, 1
      %s198 = scalar_select %p195, %s196, %s197
      %p201 = pneg %p195
      %p202 = scmp.eq.s32.totalorder %s18, 3
      %p203 = por %p201, %p202
      %p204 = scmp.ne.s32.totalorder %s196, %s199
      %p205 = scmp.eq.s32.totalorder %s18, 0
      %p206 = por %p204, %p205
      %p207 = scmp.ne.s32.totalorder %s196, %s199
      %p208 = scmp.eq.s32.totalorder %s23, 3
      %p209 = por %p207, %p208
      %p210 = scmp.ne.s32.totalorder %s199, %s200
      %p211 = scmp.eq.s32.totalorder %s23, 0
      %p212 = por %p210, %p211
      %p213 = scmp.ne.s32.totalorder %s199, %s200
      %p214 = scmp.eq.s32.totalorder %s24, 3
      %p215 = por %p213, %p214
      %p217 = scmp.ne.s32.totalorder %s200, %s216
      %p218 = scmp.eq.s32.totalorder %s24, 0
      %p219 = por %p217, %p218
      %s220 = ssub.s32 %s25, %s37
      %s221 = ssub.s32 %s26, %s33
      %s222 = sor.u32 %s220, %s221
      %p223 = scmp.eq.s32.totalorder %s222, 0
      %s225 = sadd.s32 %s224, 1
      %s226 = scalar_select %p223, %s224, %s225
      %p229 = pneg %p223
      %p230 = scmp.eq.s32.totalorder %s18, 3
      %p231 = por %p229, %p230
      %p232 = scmp.ne.s32.totalorder %s224, %s227
      %p233 = scmp.eq.s32.totalorder %s18, 0
      %p234 = por %p232, %p233
      %p235 = scmp.ne.s32.totalorder %s224, %s227
      %p236 = scmp.eq.s32.totalorder %s23, 3
      %p237 = por %p235, %p236
      %p238 = scmp.ne.s32.totalorder %s227, %s228
      %p239 = scmp.eq.s32.totalorder %s23, 0
      %p240 = por %p238, %p239
      %p241 = scmp.ne.s32.totalorder %s227, %s228
      %p242 = scmp.eq.s32.totalorder %s24, 3
      %p243 = por %p241, %p242
      %p245 = scmp.ne.s32.totalorder %s228, %s244
      %p246 = scmp.eq.s32.totalorder %s24, 0
      %p247 = por %p245, %p246
      %p248 = scmp.le.s32.totalorder 1, %s18
      %p249 = scmp.lt.s32.totalorder %s18, 5
      %p250 = pnand %p248, %p249
      %p251 = pneg %p250
      // Predicated region
      $region9: #{tpu_custom_call.1} parent=5 // pred_check
        _
      $region10: #{tpu_custom_call.1} parent=5 // pred_check_branch
        %253 = sbr.rel (%p250) target = $region12
      $region11: #{tpu_custom_call.1} parent=5 // pred_region
        %s254 = ssub.s32 %s18, 1
        // Predicated region
        $region13: #{tpu_custom_call.1} parent=11 // pred_check
          %p255 = pneg %p79
        $region14: #{tpu_custom_call.1} parent=11 // pred_check_branch
          %257 = sbr.rel (%p255) target = $region16
        $region15: #{tpu_custom_call.1} parent=11 // pred_region
          %s259 = ssub.s32 2048, 2048
          %260 = vsyncadd [#allocation5], %s259
          %s261 = sshll.u32 [#allocation4], 4
          %s262 = int_to_ptr.vmem [resolvable:$true] %s261
          %267 = dma.hbm_to_vmem [thread:$0]  %s1, 2048, %s262, [#allocation5], 128, 128, 8
        $region16: #{tpu_custom_call.1} parent=11 // pred_fallthru
          _
        // Predicated region
        $region17: #{tpu_custom_call.1} parent=11 // pred_check
          %p268 = pneg %p100
        $region18: #{tpu_custom_call.1} parent=11 // pred_check_branch
          %270 = sbr.rel (%p268) target = $region20
        $region19: #{tpu_custom_call.1} parent=11 // pred_region
          _
        $region20: #{tpu_custom_call.1} parent=11 // pred_fallthru
          _
      $region12: #{tpu_custom_call.1} parent=5 // pred_fallthru
        _
      %p271 = scmp.lt.s32.totalorder %s18, 4
      // Predicated region
      $region21: #{tpu_custom_call.1} parent=5 // pred_check
        %p272 = pneg %p271
      $region22: #{tpu_custom_call.1} parent=5 // pred_check_branch
        %274 = sbr.rel (%p272) target = $region24
      $region23: #{tpu_custom_call.1} parent=5 // pred_region
        // Predicated region
        $region25: #{tpu_custom_call.1} parent=23 // pred_check
          %p275 = pneg %p52
        $region26: #{tpu_custom_call.1} parent=23 // pred_check_branch
          %277 = sbr.rel (%p275) target = $region28
        $region27: #{tpu_custom_call.1} parent=23 // pred_region
          %s278 = sand.u32 %s42, 1
          %s279 = scalar_lea.sflag [#allocation3], %s278
          %s280 = sand.u32 %s42, 1
          %s281 = smul.addr %s280, 128
          %s282 = scalar_lea.vmem [#allocation2], %s281
          %s283 = smul.u32 16, %s26
          %s285 = ssub.s32 2048, 2048
          %286 = vsyncadd %s279, %s285
          %s287 = smul.addr %s25, 32
          %s288 = sadd.s32 %s283, %s287
          %s289 = smul.addr %s288, 128
          %s290 = scalar_lea.hbm %s0, %s289
          %s291 = sshll.u32 %s282, 4
          %s292 = int_to_ptr.vmem [resolvable:$true] %s291
          %297 = dma.hbm_to_vmem [thread:$0]  %s290, 2048, %s292, %s279, 128, 128, 8
        $region28: #{tpu_custom_call.1} parent=23 // pred_fallthru
          _
      $region24: #{tpu_custom_call.1} parent=5 // pred_fallthru
        _
      %p298 = scmp.le.s32.totalorder 1, %s18
      %p299 = scmp.lt.s32.totalorder %s18, 5
      %p300 = pnand %p298, %p299
      %p301 = pneg %p300
      // Predicated region
      $region29: #{tpu_custom_call.1} parent=5 // pred_check
        _
      $region30: #{tpu_custom_call.1} parent=5 // pred_check_branch
        %303 = sbr.rel (%p300) target = $region32
      $region31: #{tpu_custom_call.1} parent=5 // pred_region
        %s304 = ssub.s32 %s18, 1
        %s305 = sand.u32 %s45, 1
        %s306 = scalar_lea.sflag [#allocation3], %s305
        %s307 = sand.u32 %s45, 1
        %s308 = smul.addr %s307, 128
        %s309 = scalar_lea.vmem [#allocation2], %s308
        // Predicated region
        $region33: #{tpu_custom_call.1} parent=31 // pred_check
          %p310 = pneg %p58
        $region34: #{tpu_custom_call.1} parent=31 // pred_check_branch
          %312 = sbr.rel (%p310) target = $region36
        $region35: #{tpu_custom_call.1} parent=31 // pred_region
          %313 = dma.done %s306, 2048
        $region36: #{tpu_custom_call.1} parent=31 // pred_fallthru
          _
        // Predicated region
        $region37: #{tpu_custom_call.1} parent=31 // pred_check
          %p314 = pneg %p79
        $region38: #{tpu_custom_call.1} parent=31 // pred_check_branch
          %316 = sbr.rel (%p314) target = $region40
        $region39: #{tpu_custom_call.1} parent=31 // pred_region
          %317 = dma.done [#allocation5], 2048
        $region40: #{tpu_custom_call.1} parent=31 // pred_fallthru
          _
        %s318 = sand.u32 %s45, 1
        %s319 = scalar_lea.sflag [#allocation3], %s318
        %s320 = sand.u32 %s45, 1
        %s321 = smul.addr %s320, 128
        %s322 = scalar_lea.vmem [#allocation2], %s321
        %p323 = pneg %p58
        %p324 = pneg %p55
        %p325 = pneg %p79
        %p326 = pneg %p76
        %p327 = pneg %p100
        %p328 = pneg %p97
        %p329 = pneg %p128
        %p330 = pneg %p125
        %s331 = sand.u32 %s115, 1
        %s332 = sand.u32 %s115, 1
        %s333 = smul.addr %s332, 256
        %s334 = scalar_lea.vmem [#allocation6], %s333
        %p335 = pneg %p156
        %p336 = pneg %p153
        %s337 = sand.u32 %s143, 1
        %s338 = sand.u32 %s143, 1
        %s339 = smul.addr %s338, 128
        %s340 = scalar_lea.vmem [#allocation7], %s339
        %p341 = pneg %p184
        %p342 = pneg %p181
        %s343 = sand.u32 %s171, 1
        %s344 = sand.u32 %s171, 1
        %s345 = smul.addr %s344, 128
        %s346 = scalar_lea.vmem [#allocation8], %s345
        %p347 = pneg %p212
        %p348 = pneg %p209
        %s349 = smul.u32 16, %s28
        %p350 = scmp.lt.s32.totalorder %s27, 1
        %s351 = scalar_select %p350, %s27, 1
        %p352 = scmp.lt.s32.totalorder %s349, 31
        %s353 = scalar_select %p352, %s349, 31
        %s354 = smul.addr %s351, 32
        %s355 = sadd.s32 %s353, %s354
        %s356 = smul.addr %s355, 8
        %s357 = scalar_lea.vmem %s6, %s356
        %p358 = pneg %p240
        %p359 = pneg %p237
        %s360 = smul.u32 16, %s28
        %p361 = scmp.lt.s32.totalorder %s27, 1
        %s362 = scalar_select %p361, %s27, 1
        %p363 = scmp.lt.s32.totalorder %s360, 31
        %s364 = scalar_select %p363, %s360, 31
        %s365 = smul.addr %s362, 32
        %s366 = sadd.s32 %s364, %s365
        %s367 = smul.addr %s366, 8
        %s368 = scalar_lea.vmem %s7, %s367
        %s369 = smul.u32 16, %s28
        %s370 = smul.u32 16, %s28
        %s371 = smul.u32 16, %s28
        %s372 = smul.u32 16, %s28
        %s373 = smul.u32 16, %s28
        %p374 = scmp.lt.s32.totalorder %s27, 1
        %s375 = scalar_select %p374, %s27, 1
        %p376 = scmp.lt.s32.totalorder %s373, 31
        %s377 = scalar_select %p376, %s373, 31
        %s378 = smul.addr %s375, 32
        %s379 = sadd.s32 %s377, %s378
        %s380 = smul.addr %s379, 8
        %s381 = scalar_lea.vmem %s6, %s380
        %s382 = smul.u32 16, %s28
        %s383 = smul.u32 16, %s28
        %p384 = scmp.lt.s32.totalorder %s27, 1
        %s385 = scalar_select %p384, %s27, 1
        %p386 = scmp.lt.s32.totalorder %s383, 31
        %s387 = scalar_select %p386, %s383, 31
        %s388 = smul.addr %s385, 32
        %s389 = sadd.s32 %s387, %s388
        %s390 = smul.addr %s389, 8
        %s391 = scalar_lea.vmem %s7, %s390
        %s392 = smul.u32 16, %s28
        %v394 = vld [vmem:[%s309] sm:$0xff]
        %v395 = vld [vmem:[%s309 + $0x8] sm:$0xff]
        %v396 = vld [vmem:[%s309 + $0x10] sm:$0xff]
        %v397 = vld [vmem:[%s309 + $0x18] sm:$0xff]
        %v398 = vld [vmem:[%s309 + $0x20] sm:$0xff]
        %v399 = vld [vmem:[%s309 + $0x28] sm:$0xff]
        %v400 = vld [vmem:[%s309 + $0x30] sm:$0xff]
        %v401 = vld [vmem:[%s309 + $0x38] sm:$0xff]
        %v402 = vld [vmem:[%s309 + $0x40] sm:$0xff]
        %v403 = vld [vmem:[%s309 + $0x48] sm:$0xff]
        %v404 = vld [vmem:[%s309 + $0x50] sm:$0xff]
        %v405 = vld [vmem:[%s309 + $0x58] sm:$0xff]
        %v406 = vld [vmem:[%s309 + $0x60] sm:$0xff]
        %v407 = vld [vmem:[%s309 + $0x68] sm:$0xff]
        %v408 = vld [vmem:[%s309 + $0x70] sm:$0xff]
        %v409 = vld [vmem:[%s309 + $0x78] sm:$0xff]
        %v410 = vld [vmem:[%s2] sm:$0x1]
        %v411 = vmul.f32 %v394, %v394
        %v412 = vmul.f32 %v395, %v395
        %v413 = vmul.f32 %v396, %v396
        %v414 = vmul.f32 %v397, %v397
        %v415 = vmul.f32 %v398, %v398
        %v416 = vmul.f32 %v399, %v399
        %v417 = vmul.f32 %v400, %v400
        %v418 = vmul.f32 %v401, %v401
        %v419 = vmul.f32 %v402, %v402
        %v420 = vmul.f32 %v403, %v403
        %v421 = vmul.f32 %v404, %v404
        %v422 = vmul.f32 %v405, %v405
        %v423 = vmul.f32 %v406, %v406
        %v424 = vmul.f32 %v407, %v407
        %v425 = vmul.f32 %v408, %v408
        %v426 = vmul.f32 %v409, %v409
        %427 = vadd.xlane.f32.xlu0 %v411
        %v428 = vpop.xlane.xlu0 %427
        %429 = vadd.xlane.f32.xlu0 %v412
        %v430 = vpop.xlane.xlu0 %429
        %431 = vadd.xlane.f32.xlu0 %v413
        %v432 = vpop.xlane.xlu0 %431
        %433 = vadd.xlane.f32.xlu0 %v414
        %v434 = vpop.xlane.xlu0 %433
        %435 = vadd.xlane.f32.xlu0 %v415
        %v436 = vpop.xlane.xlu0 %435
        %437 = vadd.xlane.f32.xlu0 %v416
        %v438 = vpop.xlane.xlu0 %437
        %439 = vadd.xlane.f32.xlu0 %v417
        %v440 = vpop.xlane.xlu0 %439
        %441 = vadd.xlane.f32.xlu0 %v418
        %v442 = vpop.xlane.xlu0 %441
        %443 = vadd.xlane.f32.xlu0 %v419
        %v444 = vpop.xlane.xlu0 %443
        %445 = vadd.xlane.f32.xlu0 %v420
        %v446 = vpop.xlane.xlu0 %445
        %447 = vadd.xlane.f32.xlu0 %v421
        %v448 = vpop.xlane.xlu0 %447
        %449 = vadd.xlane.f32.xlu0 %v422
        %v450 = vpop.xlane.xlu0 %449
        %451 = vadd.xlane.f32.xlu0 %v423
        %v452 = vpop.xlane.xlu0 %451
        %453 = vadd.xlane.f32.xlu0 %v424
        %v454 = vpop.xlane.xlu0 %453
        %455 = vadd.xlane.f32.xlu0 %v425
        %v456 = vpop.xlane.xlu0 %455
        %457 = vadd.xlane.f32.xlu0 %v426
        %v458 = vpop.xlane.xlu0 %457
        %v459 = vrcp.pop 128.0
        %v460 = vmul.f32 %v428, %v459
        %v461 = vmul.f32 %v430, %v459
        %v462 = vmul.f32 %v432, %v459
        %v463 = vmul.f32 %v434, %v459
        %v464 = vmul.f32 %v436, %v459
        %v465 = vmul.f32 %v438, %v459
        %v466 = vmul.f32 %v440, %v459
        %v467 = vmul.f32 %v442, %v459
        %v468 = vmul.f32 %v444, %v459
        %v469 = vmul.f32 %v446, %v459
        %v470 = vmul.f32 %v448, %v459
        %v471 = vmul.f32 %v450, %v459
        %v472 = vmul.f32 %v452, %v459
        %v473 = vmul.f32 %v454, %v459
        %v474 = vmul.f32 %v456, %v459
        %v475 = vmul.f32 %v458, %v459
        %v476 = vadd.f32 %v460, 1.1920929e-07
        %v477 = vadd.f32 %v461, 1.1920929e-07
        %v478 = vadd.f32 %v462, 1.1920929e-07
        %v479 = vadd.f32 %v463, 1.1920929e-07
        %v480 = vadd.f32 %v464, 1.1920929e-07
        %v481 = vadd.f32 %v465, 1.1920929e-07
        %v482 = vadd.f32 %v466, 1.1920929e-07
        %v483 = vadd.f32 %v467, 1.1920929e-07
        %v484 = vadd.f32 %v468, 1.1920929e-07
        %v485 = vadd.f32 %v469, 1.1920929e-07
        %v486 = vadd.f32 %v470, 1.1920929e-07
        %v487 = vadd.f32 %v471, 1.1920929e-07
        %v488 = vadd.f32 %v472, 1.1920929e-07
        %v489 = vadd.f32 %v473, 1.1920929e-07
        %v490 = vadd.f32 %v474, 1.1920929e-07
        %v491 = vadd.f32 %v475, 1.1920929e-07
        %v492 = vrsqrt.pop %v476
        %v493 = vrsqrt.pop %v477
        %v494 = vrsqrt.pop %v478
        %v495 = vrsqrt.pop %v479
        %v496 = vrsqrt.pop %v480
        %v497 = vrsqrt.pop %v481
        %v498 = vrsqrt.pop %v482
        %v499 = vrsqrt.pop %v483
        %v500 = vrsqrt.pop %v484
        %v501 = vrsqrt.pop %v485
        %v502 = vrsqrt.pop %v486
        %v503 = vrsqrt.pop %v487
        %v504 = vrsqrt.pop %v488
        %v505 = vrsqrt.pop %v489
        %v506 = vrsqrt.pop %v490
        %v507 = vrsqrt.pop %v491
        %v508 = vmul.f32 %v394, %v492
        %v509 = vmul.f32 %v395, %v493
        %v510 = vmul.f32 %v396, %v494
        %v511 = vmul.f32 %v397, %v495
        %v512 = vmul.f32 %v398, %v496
        %v513 = vmul.f32 %v399, %v497
        %v514 = vmul.f32 %v400, %v498
        %v515 = vmul.f32 %v401, %v499
        %v516 = vmul.f32 %v402, %v500
        %v517 = vmul.f32 %v403, %v501
        %v518 = vmul.f32 %v404, %v502
        %v519 = vmul.f32 %v405, %v503
        %v520 = vmul.f32 %v406, %v504
        %v521 = vmul.f32 %v407, %v505
        %v522 = vmul.f32 %v408, %v506
        %v523 = vmul.f32 %v409, %v507
        %v525 = vlaneseq
        %v526 = vshrl.u32 %v525, 7
        %v527 = vsub.s32 0, %v526
        %v528 = vrot.slane %v410, %v527
        %v530 = vmul.f32 %v508, %v528
        %v531 = vmul.f32 %v509, %v528
        %v532 = vmul.f32 %v510, %v528
        %v533 = vmul.f32 %v511, %v528
        %v534 = vmul.f32 %v512, %v528
        %v535 = vmul.f32 %v513, %v528
        %v536 = vmul.f32 %v514, %v528
        %v537 = vmul.f32 %v515, %v528
        %v538 = vmul.f32 %v516, %v528
        %v539 = vmul.f32 %v517, %v528
        %v540 = vmul.f32 %v518, %v528
        %v541 = vmul.f32 %v519, %v528
        %v542 = vmul.f32 %v520, %v528
        %v543 = vmul.f32 %v521, %v528
        %v544 = vmul.f32 %v522, %v528
        %v545 = vmul.f32 %v523, %v528
        %v546 = vpack.c.bf16 %v531, %v530
        %v547 = vpack.c.bf16 %v533, %v532
        %v548 = vpack.c.bf16 %v535, %v534
        %v549 = vpack.c.bf16 %v537, %v536
        %v550 = vpack.c.bf16 %v539, %v538
        %v551 = vpack.c.bf16 %v541, %v540
        %v552 = vpack.c.bf16 %v543, %v542
        %v553 = vpack.c.bf16 %v545, %v544
        %v554 = vld [vmem:[#allocation4] sm:$0xff]
        %v555 = vld [vmem:[#allocation4 + $0x8] sm:$0xff]
        %v556 = vld [vmem:[#allocation4 + $0x10] sm:$0xff]
        %v557 = vld [vmem:[#allocation4 + $0x18] sm:$0xff]
        %v558 = vld [vmem:[#allocation4 + $0x20] sm:$0xff]
        %v559 = vld [vmem:[#allocation4 + $0x28] sm:$0xff]
        %v560 = vld [vmem:[#allocation4 + $0x30] sm:$0xff]
        %v561 = vld [vmem:[#allocation4 + $0x38] sm:$0xff]
        %v562 = vld [vmem:[#allocation4 + $0x40] sm:$0xff]
        %v563 = vld [vmem:[#allocation4 + $0x48] sm:$0xff]
        %v564 = vld [vmem:[#allocation4 + $0x50] sm:$0xff]
        %v565 = vld [vmem:[#allocation4 + $0x58] sm:$0xff]
        %v566 = vld [vmem:[#allocation4 + $0x60] sm:$0xff]
        %v567 = vld [vmem:[#allocation4 + $0x68] sm:$0xff]
        %v568 = vld [vmem:[#allocation4 + $0x70] sm:$0xff]
        %v569 = vld [vmem:[#allocation4 + $0x78] sm:$0xff]
        %v586 = vunpack.c.l.b16 %v554
        %v587 = vunpack.c.h.b16 %v554
        %v588 = vunpack.c.l.b16 %v555
        %v589 = vunpack.c.h.b16 %v555
        %v590 = vunpack.c.l.b16 %v556
        %v591 = vunpack.c.h.b16 %v556
        %v592 = vunpack.c.l.b16 %v557
        %v593 = vunpack.c.h.b16 %v557
        %v594 = vunpack.c.l.b16 %v558
        %v595 = vunpack.c.h.b16 %v558
        %v596 = vunpack.c.l.b16 %v559
        %v597 = vunpack.c.h.b16 %v559
        %v598 = vunpack.c.l.b16 %v560
        %v599 = vunpack.c.h.b16 %v560
        %v600 = vunpack.c.l.b16 %v561
        %v601 = vunpack.c.h.b16 %v561
        %v602 = vunpack.c.l.b16 %v562
        %v603 = vunpack.c.h.b16 %v562
        %v604 = vunpack.c.l.b16 %v563
        %v605 = vunpack.c.h.b16 %v563
        %v606 = vunpack.c.l.b16 %v564
        %v607 = vunpack.c.h.b16 %v564
        %v608 = vunpack.c.l.b16 %v565
        %v609 = vunpack.c.h.b16 %v565
        %v610 = vunpack.c.l.b16 %v566
        %v611 = vunpack.c.h.b16 %v566
        %v612 = vunpack.c.l.b16 %v567
        %v613 = vunpack.c.h.b16 %v567
        %v614 = vunpack.c.l.b16 %v568
        %v615 = vunpack.c.h.b16 %v568
        %v616 = vunpack.c.l.b16 %v569
        %v617 = vunpack.c.h.b16 %v569
        %v618 = vpack.c.b16 %v588, %v586
        %v619 = vpack.c.b16 %v589, %v587
        %v620 = vpack.c.b16 %v592, %v590
        %v621 = vpack.c.b16 %v593, %v591
        %v622 = vpack.c.b16 %v596, %v594
        %v623 = vpack.c.b16 %v597, %v595
        %v624 = vpack.c.b16 %v600, %v598
        %v625 = vpack.c.b16 %v601, %v599
        %v626 = vpack.c.b16 %v604, %v602
        %v627 = vpack.c.b16 %v605, %v603
        %v628 = vpack.c.b16 %v608, %v606
        %v629 = vpack.c.b16 %v609, %v607
        %v630 = vpack.c.b16 %v612, %v610
        %v631 = vpack.c.b16 %v613, %v611
        %v632 = vpack.c.b16 %v616, %v614
        %v633 = vpack.c.b16 %v617, %v615
        %650 = vmatprep.subr.bf16.mxu0 %v633
        %651 = vmatpush1.bf16.msra.mxu0 %v632
        %652 = vmatprep.subr.bf16.mxu0 %v631
        %653 = vmatpush1.bf16.msra.mxu0 %v630
        %654 = vmatprep.subr.bf16.mxu0 %v629
        %655 = vmatpush1.bf16.msra.mxu0 %v628
        %656 = vmatprep.subr.bf16.mxu0 %v627
        %657 = vmatpush1.bf16.msra.mxu0 %v626
        %658 = vmatprep.subr.bf16.mxu0 %v625
        %659 = vmatpush1.bf16.msra.mxu0 %v624
        %660 = vmatprep.subr.bf16.mxu0 %v623
        %661 = vmatpush1.bf16.msra.mxu0 %v622
        %662 = vmatprep.subr.bf16.mxu0 %v621
        %663 = vmatpush1.bf16.msra.mxu0 %v620
        %664 = vmatprep.subr.bf16.mxu0 %v619
        %665 = vmatpush1.bf16.msra.mxu0 %v618
        %666 = vmatprep.subr.bf16.mxu0 0
        %667 = vmatpush2.bf16.msra.mxu0 0
        %668 = vmatprep.subr.bf16.mxu0 0
        %669 = vmatpush2.bf16.msra.mxu0 0
        %670 = vmatprep.subr.bf16.mxu0 0
        %671 = vmatpush2.bf16.msra.mxu0 0
        %672 = vmatprep.subr.bf16.mxu0 0
        %673 = vmatpush2.bf16.msra.mxu0 0
        %674 = vmatprep.subr.bf16.mxu0 0
        %675 = vmatpush2.bf16.msra.mxu0 0
        %676 = vmatprep.subr.bf16.mxu0 0
        %677 = vmatpush2.bf16.msra.mxu0 0
        %678 = vmatprep.subr.bf16.mxu0 0
        %679 = vmatpush2.bf16.msra.mxu0 0
        %680 = vmatprep.subr.bf16.mxu0 0
        %681 = vmatpush2.bf16.msra.mxu0 0
        %682 = vmatprep.mubr.bf16.mxu0 0
        %683 = vmatmul.mubr.bf16.gmra.mxu0 %v546
        %v684 = vpop.f32.mrf.mxu0
        %v685 = vadd.f32 0.0, %v684
        %v686 = vpop.f32.mrf.mxu0
        %v687 = vadd.f32 0.0, %v686
        %v688 = vpop.f32.mrf.mxu0
        %v689 = vadd.f32 0.0, %v688
        %v690 = vpop.f32.mrf.mxu0
        %v691 = vadd.f32 0.0, %v690
        %692 = vmatprep.mubr.bf16.mxu0 0
        %693 = vmatmul.mubr.bf16.gmra.mxu0 %v547
        %v694 = vpop.f32.mrf.mxu0
        %v695 = vadd.f32 0.0, %v694
        %v696 = vpop.f32.mrf.mxu0
        %v697 = vadd.f32 0.0, %v696
        %v698 = vpop.f32.mrf.mxu0
        %v699 = vadd.f32 0.0, %v698
        %v700 = vpop.f32.mrf.mxu0
        %v701 = vadd.f32 0.0, %v700
        %702 = vmatprep.mubr.bf16.mxu0 0
        %703 = vmatmul.mubr.bf16.gmra.mxu0 %v548
        %v704 = vpop.f32.mrf.mxu0
        %v705 = vadd.f32 0.0, %v704
        %v706 = vpop.f32.mrf.mxu0
        %v707 = vadd.f32 0.0, %v706
        %v708 = vpop.f32.mrf.mxu0
        %v709 = vadd.f32 0.0, %v708
        %v710 = vpop.f32.mrf.mxu0
        %v711 = vadd.f32 0.0, %v710
        %712 = vmatprep.mubr.bf16.mxu0 0
        %713 = vmatmul.mubr.bf16.gmra.mxu0 %v549
        %v714 = vpop.f32.mrf.mxu0
        %v715 = vadd.f32 0.0, %v714
        %v716 = vpop.f32.mrf.mxu0
        %v717 = vadd.f32 0.0, %v716
        %v718 = vpop.f32.mrf.mxu0
        %v719 = vadd.f32 0.0, %v718
        %v720 = vpop.f32.mrf.mxu0
        %v721 = vadd.f32 0.0, %v720
        %722 = vmatprep.mubr.bf16.mxu0 0
        %723 = vmatmul.mubr.bf16.gmra.mxu0 %v550
        %v724 = vpop.f32.mrf.mxu0
        %v725 = vadd.f32 0.0, %v724
        %v726 = vpop.f32.mrf.mxu0
        %v727 = vadd.f32 0.0, %v726
        %v728 = vpop.f32.mrf.mxu0
        %v729 = vadd.f32 0.0, %v728
        %v730 = vpop.f32.mrf.mxu0
        %v731 = vadd.f32 0.0, %v730
        %732 = vmatprep.mubr.bf16.mxu0 0
        %733 = vmatmul.mubr.bf16.gmra.mxu0 %v551
        %v734 = vpop.f32.mrf.mxu0
        %v735 = vadd.f32 0.0, %v734
        %v736 = vpop.f32.mrf.mxu0
        %v737 = vadd.f32 0.0, %v736
        %v738 = vpop.f32.mrf.mxu0
        %v739 = vadd.f32 0.0, %v738
        %v740 = vpop.f32.mrf.mxu0
        %v741 = vadd.f32 0.0, %v740
        %742 = vmatprep.mubr.bf16.mxu0 0
        %743 = vmatmul.mubr.bf16.gmra.mxu0 %v552
        %v744 = vpop.f32.mrf.mxu0
        %v745 = vadd.f32 0.0, %v744
        %v746 = vpop.f32.mrf.mxu0
        %v747 = vadd.f32 0.0, %v746
        %v748 = vpop.f32.mrf.mxu0
        %v749 = vadd.f32 0.0, %v748
        %v750 = vpop.f32.mrf.mxu0
        %v751 = vadd.f32 0.0, %v750
        %752 = vmatprep.mubr.bf16.mxu0 0
        %753 = vmatmul.mubr.bf16.gmra.mxu0 %v553
        %v754 = vpop.f32.mrf.mxu0
        %v755 = vadd.f32 0.0, %v754
        %v756 = vpop.f32.mrf.mxu0
        %v757 = vadd.f32 0.0, %v756
        %v758 = vpop.f32.mrf.mxu0
        %v759 = vadd.f32 0.0, %v758
        %v760 = vpop.f32.mrf.mxu0
        %v761 = vadd.f32 0.0, %v760
        %762 = vdwg.mxu0
        %v763 = vmul.f32 %v685, 0.17677669
        %v764 = vmul.f32 %v689, 0.17677669
        %v765 = vmul.f32 %v695, 0.17677669
        %v766 = vmul.f32 %v699, 0.17677669
        %v767 = vmul.f32 %v705, 0.17677669
        %v768 = vmul.f32 %v709, 0.17677669
        %v769 = vmul.f32 %v715, 0.17677669
        %v770 = vmul.f32 %v719, 0.17677669
        %v771 = vmul.f32 %v725, 0.17677669
        %v772 = vmul.f32 %v729, 0.17677669
        %v773 = vmul.f32 %v735, 0.17677669
        %v774 = vmul.f32 %v739, 0.17677669
        %v775 = vmul.f32 %v745, 0.17677669
        %v776 = vmul.f32 %v749, 0.17677669
        %v777 = vmul.f32 %v755, 0.17677669
        %v778 = vmul.f32 %v759, 0.17677669
        %v779 = vpack.c.bf16 %v764, %v763
        %v780 = vpack.c.bf16 %v766, %v765
        %v781 = vpack.c.bf16 %v768, %v767
        %v782 = vpack.c.bf16 %v770, %v769
        %v783 = vpack.c.bf16 %v772, %v771
        %v784 = vpack.c.bf16 %v774, %v773
        %v785 = vpack.c.bf16 %v776, %v775
        %v786 = vpack.c.bf16 %v778, %v777
        %v795 = vunpack.c.l.b16 %v779
        %v796 = vunpack.c.h.b16 %v779
        %v797 = vunpack.c.l.b16 %v780
        %v798 = vunpack.c.h.b16 %v780
        %v799 = vunpack.c.l.b16 %v781
        %v800 = vunpack.c.h.b16 %v781
        %v801 = vunpack.c.l.b16 %v782
        %v802 = vunpack.c.h.b16 %v782
        %v803 = vunpack.c.l.b16 %v783
        %v804 = vunpack.c.h.b16 %v783
        %v805 = vunpack.c.l.b16 %v784
        %v806 = vunpack.c.h.b16 %v784
        %v807 = vunpack.c.l.b16 %v785
        %v808 = vunpack.c.h.b16 %v785
        %v809 = vunpack.c.l.b16 %v786
        %v810 = vunpack.c.h.b16 %v786
        %v811 = vpack.c.b16 %v795, %v795
        %v812 = vpack.c.b16 %v796, %v796
        %v813 = vpack.c.b16 %v797, %v797
        %v814 = vpack.c.b16 %v798, %v798
        %v815 = vpack.c.b16 %v799, %v799
        %v816 = vpack.c.b16 %v800, %v800
        %v817 = vpack.c.b16 %v801, %v801
        %v818 = vpack.c.b16 %v802, %v802
        %v819 = vpack.c.b16 %v803, %v803
        %v820 = vpack.c.b16 %v804, %v804
        %v821 = vpack.c.b16 %v805, %v805
        %v822 = vpack.c.b16 %v806, %v806
        %v823 = vpack.c.b16 %v807, %v807
        %v824 = vpack.c.b16 %v808, %v808
        %v825 = vpack.c.b16 %v809, %v809
        %v826 = vpack.c.b16 %v810, %v810
        %vm843 = vcmask 257024
        %844 = vst.msk [vmem:[%s334] sm:$0xf] %vm843, %v811
        %845 = vst.msk [vmem:[%s334 + $0x4] sm:$0xf] %vm843, %v812
        %846 = vst.msk [vmem:[%s334 + $0x8] sm:$0xf] %vm843, %v813
        %847 = vst.msk [vmem:[%s334 + $0xc] sm:$0xf] %vm843, %v814
        %848 = vst.msk [vmem:[%s334 + $0x10] sm:$0xf] %vm843, %v815
        %849 = vst.msk [vmem:[%s334 + $0x14] sm:$0xf] %vm843, %v816
        %850 = vst.msk [vmem:[%s334 + $0x18] sm:$0xf] %vm843, %v817
        %851 = vst.msk [vmem:[%s334 + $0x1c] sm:$0xf] %vm843, %v818
        %852 = vst.msk [vmem:[%s334 + $0x20] sm:$0xf] %vm843, %v819
        %853 = vst.msk [vmem:[%s334 + $0x24] sm:$0xf] %vm843, %v820
        %854 = vst.msk [vmem:[%s334 + $0x28] sm:$0xf] %vm843, %v821
        %855 = vst.msk [vmem:[%s334 + $0x2c] sm:$0xf] %vm843, %v822
        %856 = vst.msk [vmem:[%s334 + $0x30] sm:$0xf] %vm843, %v823
        %857 = vst.msk [vmem:[%s334 + $0x34] sm:$0xf] %vm843, %v824
        %858 = vst.msk [vmem:[%s334 + $0x38] sm:$0xf] %vm843, %v825
        %859 = vst.msk [vmem:[%s334 + $0x3c] sm:$0xf] %vm843, %v826
        %860 = vrot.lane.b32.xlu0 %v811, 96
        %v861 = vpop.permute.xlu0 %860
        %862 = vrot.lane.b32.xlu0 %v812, 96
        %v863 = vpop.permute.xlu0 %862
        %864 = vrot.lane.b32.xlu0 %v813, 96
        %v865 = vpop.permute.xlu0 %864
        %866 = vrot.lane.b32.xlu0 %v814, 96
        %v867 = vpop.permute.xlu0 %866
        %868 = vrot.lane.b32.xlu0 %v815, 96
        %v869 = vpop.permute.xlu0 %868
        %870 = vrot.lane.b32.xlu0 %v816, 96
        %v871 = vpop.permute.xlu0 %870
        %872 = vrot.lane.b32.xlu0 %v817, 96
        %v873 = vpop.permute.xlu0 %872
        %874 = vrot.lane.b32.xlu0 %v818, 96
        %v875 = vpop.permute.xlu0 %874
        %876 = vrot.lane.b32.xlu0 %v819, 96
        %v877 = vpop.permute.xlu0 %876
        %878 = vrot.lane.b32.xlu0 %v820, 96
        %v879 = vpop.permute.xlu0 %878
        %880 = vrot.lane.b32.xlu0 %v821, 96
        %v881 = vpop.permute.xlu0 %880
        %882 = vrot.lane.b32.xlu0 %v822, 96
        %v883 = vpop.permute.xlu0 %882
        %884 = vrot.lane.b32.xlu0 %v823, 96
        %v885 = vpop.permute.xlu0 %884
        %886 = vrot.lane.b32.xlu0 %v824, 96
        %v887 = vpop.permute.xlu0 %886
        %888 = vrot.lane.b32.xlu0 %v825, 96
        %v889 = vpop.permute.xlu0 %888
        %890 = vrot.lane.b32.xlu0 %v826, 96
        %v891 = vpop.permute.xlu0 %890
        %s908 = scalar_lea.vmem %s334, 64 [#allocation6]
        %909 = vst.msk [vmem:[%s908] sm:$0xf] %vm843, %v861
        %910 = vst.msk [vmem:[%s908 + $0x4] sm:$0xf] %vm843, %v863
        %911 = vst.msk [vmem:[%s908 + $0x8] sm:$0xf] %vm843, %v865
        %912 = vst.msk [vmem:[%s908 + $0xc] sm:$0xf] %vm843, %v867
        %913 = vst.msk [vmem:[%s908 + $0x10] sm:$0xf] %vm843, %v869
        %914 = vst.msk [vmem:[%s908 + $0x14] sm:$0xf] %vm843, %v871
        %915 = vst.msk [vmem:[%s908 + $0x18] sm:$0xf] %vm843, %v873
        %916 = vst.msk [vmem:[%s908 + $0x1c] sm:$0xf] %vm843, %v875
        %917 = vst.msk [vmem:[%s908 + $0x20] sm:$0xf] %vm843, %v877
        %918 = vst.msk [vmem:[%s908 + $0x24] sm:$0xf] %vm843, %v879
        %919 = vst.msk [vmem:[%s908 + $0x28] sm:$0xf] %vm843, %v881
        %920 = vst.msk [vmem:[%s908 + $0x2c] sm:$0xf] %vm843, %v883
        %921 = vst.msk [vmem:[%s908 + $0x30] sm:$0xf] %vm843, %v885
        %922 = vst.msk [vmem:[%s908 + $0x34] sm:$0xf] %vm843, %v887
        %923 = vst.msk [vmem:[%s908 + $0x38] sm:$0xf] %vm843, %v889
        %924 = vst.msk [vmem:[%s908 + $0x3c] sm:$0xf] %vm843, %v891
        %925 = vrot.lane.b32.xlu0 %v811, 64
        %v926 = vpop.permute.xlu0 %925
        %927 = vrot.lane.b32.xlu0 %v812, 64
        %v928 = vpop.permute.xlu0 %927
        %929 = vrot.lane.b32.xlu0 %v813, 64
        %v930 = vpop.permute.xlu0 %929
        %931 = vrot.lane.b32.xlu0 %v814, 64
        %v932 = vpop.permute.xlu0 %931
        %933 = vrot.lane.b32.xlu0 %v815, 64
        %v934 = vpop.permute.xlu0 %933
        %935 = vrot.lane.b32.xlu0 %v816, 64
        %v936 = vpop.permute.xlu0 %935
        %937 = vrot.lane.b32.xlu0 %v817, 64
        %v938 = vpop.permute.xlu0 %937
        %939 = vrot.lane.b32.xlu0 %v818, 64
        %v940 = vpop.permute.xlu0 %939
        %941 = vrot.lane.b32.xlu0 %v819, 64
        %v942 = vpop.permute.xlu0 %941
        %943 = vrot.lane.b32.xlu0 %v820, 64
        %v944 = vpop.permute.xlu0 %943
        %945 = vrot.lane.b32.xlu0 %v821, 64
        %v946 = vpop.permute.xlu0 %945
        %947 = vrot.lane.b32.xlu0 %v822, 64
        %v948 = vpop.permute.xlu0 %947
        %949 = vrot.lane.b32.xlu0 %v823, 64
        %v950 = vpop.permute.xlu0 %949
        %951 = vrot.lane.b32.xlu0 %v824, 64
        %v952 = vpop.permute.xlu0 %951
        %953 = vrot.lane.b32.xlu0 %v825, 64
        %v954 = vpop.permute.xlu0 %953
        %955 = vrot.lane.b32.xlu0 %v826, 64
        %v956 = vpop.permute.xlu0 %955
        %s973 = scalar_lea.vmem %s334, 128 [#allocation6]
        %974 = vst.msk [vmem:[%s973] sm:$0xf] %vm843, %v926
        %975 = vst.msk [vmem:[%s973 + $0x4] sm:$0xf] %vm843, %v928
        %976 = vst.msk [vmem:[%s973 + $0x8] sm:$0xf] %vm843, %v930
        %977 = vst.msk [vmem:[%s973 + $0xc] sm:$0xf] %vm843, %v932
        %978 = vst.msk [vmem:[%s973 + $0x10] sm:$0xf] %vm843, %v934
        %979 = vst.msk [vmem:[%s973 + $0x14] sm:$0xf] %vm843, %v936
        %980 = vst.msk [vmem:[%s973 + $0x18] sm:$0xf] %vm843, %v938
        %981 = vst.msk [vmem:[%s973 + $0x1c] sm:$0xf] %vm843, %v940
        %982 = vst.msk [vmem:[%s973 + $0x20] sm:$0xf] %vm843, %v942
        %983 = vst.msk [vmem:[%s973 + $0x24] sm:$0xf] %vm843, %v944
        %984 = vst.msk [vmem:[%s973 + $0x28] sm:$0xf] %vm843, %v946
        %985 = vst.msk [vmem:[%s973 + $0x2c] sm:$0xf] %vm843, %v948
        %986 = vst.msk [vmem:[%s973 + $0x30] sm:$0xf] %vm843, %v950
        %987 = vst.msk [vmem:[%s973 + $0x34] sm:$0xf] %vm843, %v952
        %988 = vst.msk [vmem:[%s973 + $0x38] sm:$0xf] %vm843, %v954
        %989 = vst.msk [vmem:[%s973 + $0x3c] sm:$0xf] %vm843, %v956
        %990 = vrot.lane.b32.xlu0 %v811, 32
        %v991 = vpop.permute.xlu0 %990
        %992 = vrot.lane.b32.xlu0 %v812, 32
        %v993 = vpop.permute.xlu0 %992
        %994 = vrot.lane.b32.xlu0 %v813, 32
        %v995 = vpop.permute.xlu0 %994
        %996 = vrot.lane.b32.xlu0 %v814, 32
        %v997 = vpop.permute.xlu0 %996
        %998 = vrot.lane.b32.xlu0 %v815, 32
        %v999 = vpop.permute.xlu0 %998
        %1000 = vrot.lane.b32.xlu0 %v816, 32
        %v1001 = vpop.permute.xlu0 %1000
        %1002 = vrot.lane.b32.xlu0 %v817, 32
        %v1003 = vpop.permute.xlu0 %1002
        %1004 = vrot.lane.b32.xlu0 %v818, 32
        %v1005 = vpop.permute.xlu0 %1004
        %1006 = vrot.lane.b32.xlu0 %v819, 32
        %v1007 = vpop.permute.xlu0 %1006
        %1008 = vrot.lane.b32.xlu0 %v820, 32
        %v1009 = vpop.permute.xlu0 %1008
        %1010 = vrot.lane.b32.xlu0 %v821, 32
        %v1011 = vpop.permute.xlu0 %1010
        %1012 = vrot.lane.b32.xlu0 %v822, 32
        %v1013 = vpop.permute.xlu0 %1012
        %1014 = vrot.lane.b32.xlu0 %v823, 32
        %v1015 = vpop.permute.xlu0 %1014
        %1016 = vrot.lane.b32.xlu0 %v824, 32
        %v1017 = vpop.permute.xlu0 %1016
        %1018 = vrot.lane.b32.xlu0 %v825, 32
        %v1019 = vpop.permute.xlu0 %1018
        %1020 = vrot.lane.b32.xlu0 %v826, 32
        %v1021 = vpop.permute.xlu0 %1020
        %s1038 = scalar_lea.vmem %s334, 192 [#allocation6]
        %1039 = vst.msk [vmem:[%s1038] sm:$0xf] %vm843, %v991
        %1040 = vst.msk [vmem:[%s1038 + $0x4] sm:$0xf] %vm843, %v993
        %1041 = vst.msk [vmem:[%s1038 + $0x8] sm:$0xf] %vm843, %v995
        %1042 = vst.msk [vmem:[%s1038 + $0xc] sm:$0xf] %vm843, %v997
        %1043 = vst.msk [vmem:[%s1038 + $0x10] sm:$0xf] %vm843, %v999
        %1044 = vst.msk [vmem:[%s1038 + $0x14] sm:$0xf] %vm843, %v1001
        %1045 = vst.msk [vmem:[%s1038 + $0x18] sm:$0xf] %vm843, %v1003
        %1046 = vst.msk [vmem:[%s1038 + $0x1c] sm:$0xf] %vm843, %v1005
        %1047 = vst.msk [vmem:[%s1038 + $0x20] sm:$0xf] %vm843, %v1007
        %1048 = vst.msk [vmem:[%s1038 + $0x24] sm:$0xf] %vm843, %v1009
        %1049 = vst.msk [vmem:[%s1038 + $0x28] sm:$0xf] %vm843, %v1011
        %1050 = vst.msk [vmem:[%s1038 + $0x2c] sm:$0xf] %vm843, %v1013
        %1051 = vst.msk [vmem:[%s1038 + $0x30] sm:$0xf] %vm843, %v1015
        %1052 = vst.msk [vmem:[%s1038 + $0x34] sm:$0xf] %vm843, %v1017
        %1053 = vst.msk [vmem:[%s1038 + $0x38] sm:$0xf] %vm843, %v1019
        %1054 = vst.msk [vmem:[%s1038 + $0x3c] sm:$0xf] %vm843, %v1021
        %v1055 = vpack.c.bf16 %v691, %v687
        %v1056 = vpack.c.bf16 %v701, %v697
        %v1057 = vpack.c.bf16 %v711, %v707
        %v1058 = vpack.c.bf16 %v721, %v717
        %v1059 = vpack.c.bf16 %v731, %v727
        %v1060 = vpack.c.bf16 %v741, %v737
        %v1061 = vpack.c.bf16 %v751, %v747
        %v1062 = vpack.c.bf16 %v761, %v757
        %v1071 = vunpack.c.l.b16 %v1055
        %v1072 = vunpack.c.h.b16 %v1055
        %v1073 = vunpack.c.l.b16 %v1056
        %v1074 = vunpack.c.h.b16 %v1056
        %v1075 = vunpack.c.l.b16 %v1057
        %v1076 = vunpack.c.h.b16 %v1057
        %v1077 = vunpack.c.l.b16 %v1058
        %v1078 = vunpack.c.h.b16 %v1058
        %v1079 = vunpack.c.l.b16 %v1059
        %v1080 = vunpack.c.h.b16 %v1059
        %v1081 = vunpack.c.l.b16 %v1060
        %v1082 = vunpack.c.h.b16 %v1060
        %v1083 = vunpack.c.l.b16 %v1061
        %v1084 = vunpack.c.h.b16 %v1061
        %v1085 = vunpack.c.l.b16 %v1062
        %v1086 = vunpack.c.h.b16 %v1062
        %v1087 = vpack.c.b16 %v1071, %v1071
        %v1088 = vpack.c.b16 %v1072, %v1072
        %v1089 = vpack.c.b16 %v1073, %v1073
        %v1090 = vpack.c.b16 %v1074, %v1074
        %v1091 = vpack.c.b16 %v1075, %v1075
        %v1092 = vpack.c.b16 %v1076, %v1076
        %v1093 = vpack.c.b16 %v1077, %v1077
        %v1094 = vpack.c.b16 %v1078, %v1078
        %v1095 = vpack.c.b16 %v1079, %v1079
        %v1096 = vpack.c.b16 %v1080, %v1080
        %v1097 = vpack.c.b16 %v1081, %v1081
        %v1098 = vpack.c.b16 %v1082, %v1082
        %v1099 = vpack.c.b16 %v1083, %v1083
        %v1100 = vpack.c.b16 %v1084, %v1084
        %v1101 = vpack.c.b16 %v1085, %v1085
        %v1102 = vpack.c.b16 %v1086, %v1086
        %1119 = vst.msk [vmem:[%s340] sm:$0xf] %vm843, %v1087
        %1120 = vst.msk [vmem:[%s340 + $0x4] sm:$0xf] %vm843, %v1088
        %1121 = vst.msk [vmem:[%s340 + $0x8] sm:$0xf] %vm843, %v1089
        %1122 = vst.msk [vmem:[%s340 + $0xc] sm:$0xf] %vm843, %v1090
        %1123 = vst.msk [vmem:[%s340 + $0x10] sm:$0xf] %vm843, %v1091
        %1124 = vst.msk [vmem:[%s340 + $0x14] sm:$0xf] %vm843, %v1092
        %1125 = vst.msk [vmem:[%s340 + $0x18] sm:$0xf] %vm843, %v1093
        %1126 = vst.msk [vmem:[%s340 + $0x1c] sm:$0xf] %vm843, %v1094
        %1127 = vst.msk [vmem:[%s340 + $0x20] sm:$0xf] %vm843, %v1095
        %1128 = vst.msk [vmem:[%s340 + $0x24] sm:$0xf] %vm843, %v1096
        %1129 = vst.msk [vmem:[%s340 + $0x28] sm:$0xf] %vm843, %v1097
        %1130 = vst.msk [vmem:[%s340 + $0x2c] sm:$0xf] %vm843, %v1098
        %1131 = vst.msk [vmem:[%s340 + $0x30] sm:$0xf] %vm843, %v1099
        %1132 = vst.msk [vmem:[%s340 + $0x34] sm:$0xf] %vm843, %v1100
        %1133 = vst.msk [vmem:[%s340 + $0x38] sm:$0xf] %vm843, %v1101
        %1134 = vst.msk [vmem:[%s340 + $0x3c] sm:$0xf] %vm843, %v1102
        %1135 = vrot.lane.b32.xlu0 %v1087, 64
        %v1136 = vpop.permute.xlu0 %1135
        %1137 = vrot.lane.b32.xlu0 %v1088, 64
        %v1138 = vpop.permute.xlu0 %1137
        %1139 = vrot.lane.b32.xlu0 %v1089, 64
        %v1140 = vpop.permute.xlu0 %1139
        %1141 = vrot.lane.b32.xlu0 %v1090, 64
        %v1142 = vpop.permute.xlu0 %1141
        %1143 = vrot.lane.b32.xlu0 %v1091, 64
        %v1144 = vpop.permute.xlu0 %1143
        %1145 = vrot.lane.b32.xlu0 %v1092, 64
        %v1146 = vpop.permute.xlu0 %1145
        %1147 = vrot.lane.b32.xlu0 %v1093, 64
        %v1148 = vpop.permute.xlu0 %1147
        %1149 = vrot.lane.b32.xlu0 %v1094, 64
        %v1150 = vpop.permute.xlu0 %1149
        %1151 = vrot.lane.b32.xlu0 %v1095, 64
        %v1152 = vpop.permute.xlu0 %1151
        %1153 = vrot.lane.b32.xlu0 %v1096, 64
        %v1154 = vpop.permute.xlu0 %1153
        %1155 = vrot.lane.b32.xlu0 %v1097, 64
        %v1156 = vpop.permute.xlu0 %1155
        %1157 = vrot.lane.b32.xlu0 %v1098, 64
        %v1158 = vpop.permute.xlu0 %1157
        %1159 = vrot.lane.b32.xlu0 %v1099, 64
        %v1160 = vpop.permute.xlu0 %1159
        %1161 = vrot.lane.b32.xlu0 %v1100, 64
        %v1162 = vpop.permute.xlu0 %1161
        %1163 = vrot.lane.b32.xlu0 %v1101, 64
        %v1164 = vpop.permute.xlu0 %1163
        %1165 = vrot.lane.b32.xlu0 %v1102, 64
        %v1166 = vpop.permute.xlu0 %1165
        %1183 = vst.msk [vmem:[%s346] sm:$0xf] %vm843, %v1136
        %1184 = vst.msk [vmem:[%s346 + $0x4] sm:$0xf] %vm843, %v1138
        %1185 = vst.msk [vmem:[%s346 + $0x8] sm:$0xf] %vm843, %v1140
        %1186 = vst.msk [vmem:[%s346 + $0xc] sm:$0xf] %vm843, %v1142
        %1187 = vst.msk [vmem:[%s346 + $0x10] sm:$0xf] %vm843, %v1144
        %1188 = vst.msk [vmem:[%s346 + $0x14] sm:$0xf] %vm843, %v1146
        %1189 = vst.msk [vmem:[%s346 + $0x18] sm:$0xf] %vm843, %v1148
        %1190 = vst.msk [vmem:[%s346 + $0x1c] sm:$0xf] %vm843, %v1150
        %1191 = vst.msk [vmem:[%s346 + $0x20] sm:$0xf] %vm843, %v1152
        %1192 = vst.msk [vmem:[%s346 + $0x24] sm:$0xf] %vm843, %v1154
        %1193 = vst.msk [vmem:[%s346 + $0x28] sm:$0xf] %vm843, %v1156
        %1194 = vst.msk [vmem:[%s346 + $0x2c] sm:$0xf] %vm843, %v1158
        %1195 = vst.msk [vmem:[%s346 + $0x30] sm:$0xf] %vm843, %v1160
        %1196 = vst.msk [vmem:[%s346 + $0x34] sm:$0xf] %vm843, %v1162
        %1197 = vst.msk [vmem:[%s346 + $0x38] sm:$0xf] %vm843, %v1164
        %1198 = vst.msk [vmem:[%s346 + $0x3c] sm:$0xf] %vm843, %v1166
        %1199 = vrot.lane.b32.xlu0 %v1087, 96
        %v1200 = vpop.permute.xlu0 %1199
        %1201 = vrot.lane.b32.xlu0 %v1088, 96
        %v1202 = vpop.permute.xlu0 %1201
        %1203 = vrot.lane.b32.xlu0 %v1089, 96
        %v1204 = vpop.permute.xlu0 %1203
        %1205 = vrot.lane.b32.xlu0 %v1090, 96
        %v1206 = vpop.permute.xlu0 %1205
        %1207 = vrot.lane.b32.xlu0 %v1091, 96
        %v1208 = vpop.permute.xlu0 %1207
        %1209 = vrot.lane.b32.xlu0 %v1092, 96
        %v1210 = vpop.permute.xlu0 %1209
        %1211 = vrot.lane.b32.xlu0 %v1093, 96
        %v1212 = vpop.permute.xlu0 %1211
        %1213 = vrot.lane.b32.xlu0 %v1094, 96
        %v1214 = vpop.permute.xlu0 %1213
        %1215 = vrot.lane.b32.xlu0 %v1095, 96
        %v1216 = vpop.permute.xlu0 %1215
        %1217 = vrot.lane.b32.xlu0 %v1096, 96
        %v1218 = vpop.permute.xlu0 %1217
        %1219 = vrot.lane.b32.xlu0 %v1097, 96
        %v1220 = vpop.permute.xlu0 %1219
        %1221 = vrot.lane.b32.xlu0 %v1098, 96
        %v1222 = vpop.permute.xlu0 %1221
        %1223 = vrot.lane.b32.xlu0 %v1099, 96
        %v1224 = vpop.permute.xlu0 %1223
        %1225 = vrot.lane.b32.xlu0 %v1100, 96
        %v1226 = vpop.permute.xlu0 %1225
        %1227 = vrot.lane.b32.xlu0 %v1101, 96
        %v1228 = vpop.permute.xlu0 %1227
        %1229 = vrot.lane.b32.xlu0 %v1102, 96
        %v1230 = vpop.permute.xlu0 %1229
        %s1247 = scalar_lea.vmem %s340, 64 [#allocation7]
        %1248 = vst.msk [vmem:[%s1247] sm:$0xf] %vm843, %v1200
        %1249 = vst.msk [vmem:[%s1247 + $0x4] sm:$0xf] %vm843, %v1202
        %1250 = vst.msk [vmem:[%s1247 + $0x8] sm:$0xf] %vm843, %v1204
        %1251 = vst.msk [vmem:[%s1247 + $0xc] sm:$0xf] %vm843, %v1206
        %1252 = vst.msk [vmem:[%s1247 + $0x10] sm:$0xf] %vm843, %v1208
        %1253 = vst.msk [vmem:[%s1247 + $0x14] sm:$0xf] %vm843, %v1210
        %1254 = vst.msk [vmem:[%s1247 + $0x18] sm:$0xf] %vm843, %v1212
        %1255 = vst.msk [vmem:[%s1247 + $0x1c] sm:$0xf] %vm843, %v1214
        %1256 = vst.msk [vmem:[%s1247 + $0x20] sm:$0xf] %vm843, %v1216
        %1257 = vst.msk [vmem:[%s1247 + $0x24] sm:$0xf] %vm843, %v1218
        %1258 = vst.msk [vmem:[%s1247 + $0x28] sm:$0xf] %vm843, %v1220
        %1259 = vst.msk [vmem:[%s1247 + $0x2c] sm:$0xf] %vm843, %v1222
        %1260 = vst.msk [vmem:[%s1247 + $0x30] sm:$0xf] %vm843, %v1224
        %1261 = vst.msk [vmem:[%s1247 + $0x34] sm:$0xf] %vm843, %v1226
        %1262 = vst.msk [vmem:[%s1247 + $0x38] sm:$0xf] %vm843, %v1228
        %1263 = vst.msk [vmem:[%s1247 + $0x3c] sm:$0xf] %vm843, %v1230
        %1264 = vrot.lane.b32.xlu0 %v1087, 32
        %v1265 = vpop.permute.xlu0 %1264
        %1266 = vrot.lane.b32.xlu0 %v1088, 32
        %v1267 = vpop.permute.xlu0 %1266
        %1268 = vrot.lane.b32.xlu0 %v1089, 32
        %v1269 = vpop.permute.xlu0 %1268
        %1270 = vrot.lane.b32.xlu0 %v1090, 32
        %v1271 = vpop.permute.xlu0 %1270
        %1272 = vrot.lane.b32.xlu0 %v1091, 32
        %v1273 = vpop.permute.xlu0 %1272
        %1274 = vrot.lane.b32.xlu0 %v1092, 32
        %v1275 = vpop.permute.xlu0 %1274
        %1276 = vrot.lane.b32.xlu0 %v1093, 32
        %v1277 = vpop.permute.xlu0 %1276
        %1278 = vrot.lane.b32.xlu0 %v1094, 32
        %v1279 = vpop.permute.xlu0 %1278
        %1280 = vrot.lane.b32.xlu0 %v1095, 32
        %v1281 = vpop.permute.xlu0 %1280
        %1282 = vrot.lane.b32.xlu0 %v1096, 32
        %v1283 = vpop.permute.xlu0 %1282
        %1284 = vrot.lane.b32.xlu0 %v1097, 32
        %v1285 = vpop.permute.xlu0 %1284
        %1286 = vrot.lane.b32.xlu0 %v1098, 32
        %v1287 = vpop.permute.xlu0 %1286
        %1288 = vrot.lane.b32.xlu0 %v1099, 32
        %v1289 = vpop.permute.xlu0 %1288
        %1290 = vrot.lane.b32.xlu0 %v1100, 32
        %v1291 = vpop.permute.xlu0 %1290
        %1292 = vrot.lane.b32.xlu0 %v1101, 32
        %v1293 = vpop.permute.xlu0 %1292
        %1294 = vrot.lane.b32.xlu0 %v1102, 32
        %v1295 = vpop.permute.xlu0 %1294
        %s1312 = scalar_lea.vmem %s346, 64 [#allocation8]
        %1313 = vst.msk [vmem:[%s1312] sm:$0xf] %vm843, %v1265
        %1314 = vst.msk [vmem:[%s1312 + $0x4] sm:$0xf] %vm843, %v1267
        %1315 = vst.msk [vmem:[%s1312 + $0x8] sm:$0xf] %vm843, %v1269
        %1316 = vst.msk [vmem:[%s1312 + $0xc] sm:$0xf] %vm843, %v1271
        %1317 = vst.msk [vmem:[%s1312 + $0x10] sm:$0xf] %vm843, %v1273
        %1318 = vst.msk [vmem:[%s1312 + $0x14] sm:$0xf] %vm843, %v1275
        %1319 = vst.msk [vmem:[%s1312 + $0x18] sm:$0xf] %vm843, %v1277
        %1320 = vst.msk [vmem:[%s1312 + $0x1c] sm:$0xf] %vm843, %v1279
        %1321 = vst.msk [vmem:[%s1312 + $0x20] sm:$0xf] %vm843, %v1281
        %1322 = vst.msk [vmem:[%s1312 + $0x24] sm:$0xf] %vm843, %v1283
        %1323 = vst.msk [vmem:[%s1312 + $0x28] sm:$0xf] %vm843, %v1285
        %1324 = vst.msk [vmem:[%s1312 + $0x2c] sm:$0xf] %vm843, %v1287
        %1325 = vst.msk [vmem:[%s1312 + $0x30] sm:$0xf] %vm843, %v1289
        %1326 = vst.msk [vmem:[%s1312 + $0x34] sm:$0xf] %vm843, %v1291
        %1327 = vst.msk [vmem:[%s1312 + $0x38] sm:$0xf] %vm843, %v1293
        %1328 = vst.msk [vmem:[%s1312 + $0x3c] sm:$0xf] %vm843, %v1295
        %vm1329 = vcmask 523264
        %1330 = vst.msk [vmem:[%s381] sm:$0xff] %vm1329, %v687
        %1331 = vst.msk [vmem:[%s381 + $0x8] sm:$0xff] %vm1329, %v691
        %1332 = vst.msk [vmem:[%s381 + $0x10] sm:$0xff] %vm1329, %v697
        %1333 = vst.msk [vmem:[%s381 + $0x18] sm:$0xff] %vm1329, %v701
        %1334 = vst.msk [vmem:[%s381 + $0x20] sm:$0xff] %vm1329, %v707
        %1335 = vst.msk [vmem:[%s381 + $0x28] sm:$0xff] %vm1329, %v711
        %1336 = vst.msk [vmem:[%s381 + $0x30] sm:$0xff] %vm1329, %v717
        %1337 = vst.msk [vmem:[%s381 + $0x38] sm:$0xff] %vm1329, %v721
        %1338 = vst.msk [vmem:[%s381 + $0x40] sm:$0xff] %vm1329, %v727
        %1339 = vst.msk [vmem:[%s381 + $0x48] sm:$0xff] %vm1329, %v731
        %1340 = vst.msk [vmem:[%s381 + $0x50] sm:$0xff] %vm1329, %v737
        %1341 = vst.msk [vmem:[%s381 + $0x58] sm:$0xff] %vm1329, %v741
        %1342 = vst.msk [vmem:[%s381 + $0x60] sm:$0xff] %vm1329, %v747
        %1343 = vst.msk [vmem:[%s381 + $0x68] sm:$0xff] %vm1329, %v751
        %1344 = vst.msk [vmem:[%s381 + $0x70] sm:$0xff] %vm1329, %v757
        %1345 = vst.msk [vmem:[%s381 + $0x78] sm:$0xff] %vm1329, %v761
        %1362 = vrot.lane.b32.xlu0 %v687, 64
        %v1363 = vpop.permute.xlu0 %1362
        %1364 = vrot.lane.b32.xlu0 %v691, 64
        %v1365 = vpop.permute.xlu0 %1364
        %1366 = vrot.lane.b32.xlu0 %v697, 64
        %v1367 = vpop.permute.xlu0 %1366
        %1368 = vrot.lane.b32.xlu0 %v701, 64
        %v1369 = vpop.permute.xlu0 %1368
        %1370 = vrot.lane.b32.xlu0 %v707, 64
        %v1371 = vpop.permute.xlu0 %1370
        %1372 = vrot.lane.b32.xlu0 %v711, 64
        %v1373 = vpop.permute.xlu0 %1372
        %1374 = vrot.lane.b32.xlu0 %v717, 64
        %v1375 = vpop.permute.xlu0 %1374
        %1376 = vrot.lane.b32.xlu0 %v721, 64
        %v1377 = vpop.permute.xlu0 %1376
        %1378 = vrot.lane.b32.xlu0 %v727, 64
        %v1379 = vpop.permute.xlu0 %1378
        %1380 = vrot.lane.b32.xlu0 %v731, 64
        %v1381 = vpop.permute.xlu0 %1380
        %1382 = vrot.lane.b32.xlu0 %v737, 64
        %v1383 = vpop.permute.xlu0 %1382
        %1384 = vrot.lane.b32.xlu0 %v741, 64
        %v1385 = vpop.permute.xlu0 %1384
        %1386 = vrot.lane.b32.xlu0 %v747, 64
        %v1387 = vpop.permute.xlu0 %1386
        %1388 = vrot.lane.b32.xlu0 %v751, 64
        %v1389 = vpop.permute.xlu0 %1388
        %1390 = vrot.lane.b32.xlu0 %v757, 64
        %v1391 = vpop.permute.xlu0 %1390
        %1392 = vrot.lane.b32.xlu0 %v761, 64
        %v1393 = vpop.permute.xlu0 %1392
        %1410 = vst.msk [vmem:[%s391] sm:$0xff] %vm1329, %v1363
        %1411 = vst.msk [vmem:[%s391 + $0x8] sm:$0xff] %vm1329, %v1365
        %1412 = vst.msk [vmem:[%s391 + $0x10] sm:$0xff] %vm1329, %v1367
        %1413 = vst.msk [vmem:[%s391 + $0x18] sm:$0xff] %vm1329, %v1369
        %1414 = vst.msk [vmem:[%s391 + $0x20] sm:$0xff] %vm1329, %v1371
        %1415 = vst.msk [vmem:[%s391 + $0x28] sm:$0xff] %vm1329, %v1373
        %1416 = vst.msk [vmem:[%s391 + $0x30] sm:$0xff] %vm1329, %v1375
        %1417 = vst.msk [vmem:[%s391 + $0x38] sm:$0xff] %vm1329, %v1377
        %1418 = vst.msk [vmem:[%s391 + $0x40] sm:$0xff] %vm1329, %v1379
        %1419 = vst.msk [vmem:[%s391 + $0x48] sm:$0xff] %vm1329, %v1381
        %1420 = vst.msk [vmem:[%s391 + $0x50] sm:$0xff] %vm1329, %v1383
        %1421 = vst.msk [vmem:[%s391 + $0x58] sm:$0xff] %vm1329, %v1385
        %1422 = vst.msk [vmem:[%s391 + $0x60] sm:$0xff] %vm1329, %v1387
        %1423 = vst.msk [vmem:[%s391 + $0x68] sm:$0xff] %vm1329, %v1389
        %1424 = vst.msk [vmem:[%s391 + $0x70] sm:$0xff] %vm1329, %v1391
        %1425 = vst.msk [vmem:[%s391 + $0x78] sm:$0xff] %vm1329, %v1393
        %s1426 = sand.u32 %s115, 1
        %s1427 = sand.u32 %s115, 1
        %s1428 = smul.addr %s1427, 256
        %s1429 = scalar_lea.vmem [#allocation6], %s1428
        %s1430 = sand.u32 %s143, 1
        %s1431 = sand.u32 %s143, 1
        %s1432 = smul.addr %s1431, 128
        %s1433 = scalar_lea.vmem [#allocation7], %s1432
        %s1434 = sand.u32 %s171, 1
        %s1435 = sand.u32 %s171, 1
        %s1436 = smul.addr %s1435, 128
        %s1437 = scalar_lea.vmem [#allocation8], %s1436
        %s1438 = smul.u32 16, %s28
        %p1439 = scmp.lt.s32.totalorder %s27, 1
        %s1440 = scalar_select %p1439, %s27, 1
        %p1441 = scmp.lt.s32.totalorder %s1438, 31
        %s1442 = scalar_select %p1441, %s1438, 31
        %s1443 = smul.addr %s1440, 32
        %s1444 = sadd.s32 %s1442, %s1443
        %s1445 = smul.addr %s1444, 8
        %s1446 = scalar_lea.vmem %s6, %s1445
        %s1447 = smul.u32 16, %s28
        %p1448 = scmp.lt.s32.totalorder %s27, 1
        %s1449 = scalar_select %p1448, %s27, 1
        %p1450 = scmp.lt.s32.totalorder %s1447, 31
        %s1451 = scalar_select %p1450, %s1447, 31
        %s1452 = smul.addr %s1449, 32
        %s1453 = sadd.s32 %s1451, %s1452
        %s1454 = smul.addr %s1453, 8
        %s1455 = scalar_lea.vmem %s7, %s1454
        // Predicated region
        $region41: #{tpu_custom_call.1} parent=31 // pred_check
          %p1456 = pneg %p125
        $region42: #{tpu_custom_call.1} parent=31 // pred_check_branch
          %1458 = sbr.rel (%p1456) target = $region44
        $region43: #{tpu_custom_call.1} parent=31 // pred_region
          %s1459 = smul.u32 16, %s28
          %s1460 = smul.addr %s27, 128
          %s1461 = sadd.s32 %s1459, %s1460
          %s1462 = smul.addr %s1461, 4
          %s1463 = scalar_lea.vmem %s3, %s1462
          // Predicated region
          $region45: #{tpu_custom_call.1} parent=43 // pred_check
            _
          $region46: #{tpu_custom_call.1} parent=43 // pred_check_branch
            %1465 = sbr.rel (0) target = $region48
          $region47: #{tpu_custom_call.1} parent=43 // pred_region
            // Predicated region
            $region49: #{tpu_custom_call.1} parent=47 // pred_check
              _
            $region50: #{tpu_custom_call.1} parent=47 // pred_check_branch
              %1467 = sbr.rel target = $region52
            $region51: #{tpu_custom_call.1} parent=47 // pred_region
              // Predicated region
              $region64: #{tpu_custom_call.1} parent=51 // pred_check
                _
              $region65: #{tpu_custom_call.1} parent=51 // pred_check_branch
                %1609 = sbr.rel (0) target = $region67
              $region66: #{tpu_custom_call.1} parent=51 // pred_region
                loop: start=0, step=1, limit=1
                $region68: #{tpu_custom_call.1} parent=66 // loop_pre_header
                  _
                $region69: #{tpu_custom_call.1} parent=66 // loop_header
                  %s1611 = sphi 0, %s1615
                  %p1612 = scmp.ge.s32.totalorder %s1611, 1
                  %s1616 = sphi %s1429, %s1429
                  %s1617 = sphi %s1463, %s1463
                $region70: #{tpu_custom_call.1} parent=66 // loop_header_branch
                  %1614 = sbr.rel (%p1612) target = $region74
                $region71: #{tpu_custom_call.1} parent=66 // loop_body
                  _
                $region72: #{tpu_custom_call.1} parent=66 // loop_footer
                  %s1615 = sadd.s32 1, %s1611
                $region73: #{tpu_custom_call.1} parent=66 // loop_footer_branch
                  %1610 = sbr.rel target = $region69
                $region74: #{tpu_custom_call.1} parent=66 // loop_exit
                  _
                %s1619 = ssub.s32 16, 1
                loop: start=0, step=1, limit=1
                $region75: #{tpu_custom_call.1} parent=66 // loop_pre_header
                  _
                $region76: #{tpu_custom_call.1} parent=66 // loop_header
                  %s1621 = sphi 0, %s1625
                  %p1622 = scmp.ge.s32.totalorder %s1621, 1
                  %s1626 = sphi %s1429, %s1429
                  %s1627 = sphi %s1463, %s1463
                $region77: #{tpu_custom_call.1} parent=66 // loop_header_branch
                  %1624 = sbr.rel (%p1622) target = $region81
                $region78: #{tpu_custom_call.1} parent=66 // loop_body
                  %v1628 = vld [vmem:[%s1626] sm:%s1619]
                  %1629 = vst [vmem:[%s1627] sm:%s1619] %v1628
                  %v1630 = vld [vmem:[%s1626 + $0x4] sm:%s1619]
                  %1631 = vst [vmem:[%s1627 + $0x4] sm:%s1619] %v1630
                  %v1632 = vld [vmem:[%s1626 + $0x8] sm:%s1619]
                  %1633 = vst [vmem:[%s1627 + $0x8] sm:%s1619] %v1632
                  %v1634 = vld [vmem:[%s1626 + $0xc] sm:%s1619]
                  %1635 = vst [vmem:[%s1627 + $0xc] sm:%s1619] %v1634
                  %v1636 = vld [vmem:[%s1626 + $0x10] sm:%s1619]
                  %1637 = vst [vmem:[%s1627 + $0x10] sm:%s1619] %v1636
                  %v1638 = vld [vmem:[%s1626 + $0x14] sm:%s1619]
                  %1639 = vst [vmem:[%s1627 + $0x14] sm:%s1619] %v1638
                  %v1640 = vld [vmem:[%s1626 + $0x18] sm:%s1619]
                  %1641 = vst [vmem:[%s1627 + $0x18] sm:%s1619] %v1640
                  %v1642 = vld [vmem:[%s1626 + $0x1c] sm:%s1619]
                  %1643 = vst [vmem:[%s1627 + $0x1c] sm:%s1619] %v1642
                  %v1644 = vld [vmem:[%s1626 + $0x20] sm:%s1619]
                  %1645 = vst [vmem:[%s1627 + $0x20] sm:%s1619] %v1644
                  %v1646 = vld [vmem:[%s1626 + $0x24] sm:%s1619]
                  %1647 = vst [vmem:[%s1627 + $0x24] sm:%s1619] %v1646
                  %v1648 = vld [vmem:[%s1626 + $0x28] sm:%s1619]
                  %1649 = vst [vmem:[%s1627 + $0x28] sm:%s1619] %v1648
                  %v1650 = vld [vmem:[%s1626 + $0x2c] sm:%s1619]
                  %1651 = vst [vmem:[%s1627 + $0x2c] sm:%s1619] %v1650
                  %v1652 = vld [vmem:[%s1626 + $0x30] sm:%s1619]
                  %1653 = vst [vmem:[%s1627 + $0x30] sm:%s1619] %v1652
                  %v1654 = vld [vmem:[%s1626 + $0x34] sm:%s1619]
                  %1655 = vst [vmem:[%s1627 + $0x34] sm:%s1619] %v1654
                  %v1656 = vld [vmem:[%s1626 + $0x38] sm:%s1619]
                  %1657 = vst [vmem:[%s1627 + $0x38] sm:%s1619] %v1656
                  %v1658 = vld [vmem:[%s1626 + $0x3c] sm:%s1619]
                  %1659 = vst [vmem:[%s1627 + $0x3c] sm:%s1619] %v1658
                  %v1660 = vld [vmem:[%s1626 + $0x40] sm:%s1619]
                  %1661 = vst [vmem:[%s1627 + $0x80] sm:%s1619] %v1660
                  %v1662 = vld [vmem:[%s1626 + $0x44] sm:%s1619]
                  %1663 = vst [vmem:[%s1627 + $0x84] sm:%s1619] %v1662
                  %v1664 = vld [vmem:[%s1626 + $0x48] sm:%s1619]
                  %1665 = vst [vmem:[%s1627 + $0x88] sm:%s1619] %v1664
                  %v1666 = vld [vmem:[%s1626 + $0x4c] sm:%s1619]
                  %1667 = vst [vmem:[%s1627 + $0x8c] sm:%s1619] %v1666
                  %v1668 = vld [vmem:[%s1626 + $0x50] sm:%s1619]
                  %1669 = vst [vmem:[%s1627 + $0x90] sm:%s1619] %v1668
                  %v1670 = vld [vmem:[%s1626 + $0x54] sm:%s1619]
                  %1671 = vst [vmem:[%s1627 + $0x94] sm:%s1619] %v1670
                  %v1672 = vld [vmem:[%s1626 + $0x58] sm:%s1619]
                  %1673 = vst [vmem:[%s1627 + $0x98] sm:%s1619] %v1672
                  %v1674 = vld [vmem:[%s1626 + $0x5c] sm:%s1619]
                  %1675 = vst [vmem:[%s1627 + $0x9c] sm:%s1619] %v1674
                  %v1676 = vld [vmem:[%s1626 + $0x60] sm:%s1619]
                  %1677 = vst [vmem:[%s1627 + $0xa0] sm:%s1619] %v1676
                  %v1678 = vld [vmem:[%s1626 + $0x64] sm:%s1619]
                  %1679 = vst [vmem:[%s1627 + $0xa4] sm:%s1619] %v1678
                  %v1680 = vld [vmem:[%s1626 + $0x68] sm:%s1619]
                  %1681 = vst [vmem:[%s1627 + $0xa8] sm:%s1619] %v1680
                  %v1682 = vld [vmem:[%s1626 + $0x6c] sm:%s1619]
                  %1683 = vst [vmem:[%s1627 + $0xac] sm:%s1619] %v1682
                  %v1684 = vld [vmem:[%s1626 + $0x70] sm:%s1619]
                  %1685 = vst [vmem:[%s1627 + $0xb0] sm:%s1619] %v1684
                  %v1686 = vld [vmem:[%s1626 + $0x74] sm:%s1619]
                  %1687 = vst [vmem:[%s1627 + $0xb4] sm:%s1619] %v1686
                  %v1688 = vld [vmem:[%s1626 + $0x78] sm:%s1619]
                  %1689 = vst [vmem:[%s1627 + $0xb8] sm:%s1619] %v1688
                  %v1690 = vld [vmem:[%s1626 + $0x7c] sm:%s1619]
                  %1691 = vst [vmem:[%s1627 + $0xbc] sm:%s1619] %v1690
                  %v1692 = vld [vmem:[%s1626 + $0x80] sm:%s1619]
                  %1693 = vst [vmem:[%s1627 + $0x100] sm:%s1619] %v1692
                  %v1694 = vld [vmem:[%s1626 + $0x84] sm:%s1619]
                  %1695 = vst [vmem:[%s1627 + $0x104] sm:%s1619] %v1694
                  %v1696 = vld [vmem:[%s1626 + $0x88] sm:%s1619]
                  %1697 = vst [vmem:[%s1627 + $0x108] sm:%s1619] %v1696
                  %v1698 = vld [vmem:[%s1626 + $0x8c] sm:%s1619]
                  %1699 = vst [vmem:[%s1627 + $0x10c] sm:%s1619] %v1698
                  %v1700 = vld [vmem:[%s1626 + $0x90] sm:%s1619]
                  %1701 = vst [vmem:[%s1627 + $0x110] sm:%s1619] %v1700
                  %v1702 = vld [vmem:[%s1626 + $0x94] sm:%s1619]
                  %1703 = vst [vmem:[%s1627 + $0x114] sm:%s1619] %v1702
                  %v1704 = vld [vmem:[%s1626 + $0x98] sm:%s1619]
                  %1705 = vst [vmem:[%s1627 + $0x118] sm:%s1619] %v1704
                  %v1706 = vld [vmem:[%s1626 + $0x9c] sm:%s1619]
                  %1707 = vst [vmem:[%s1627 + $0x11c] sm:%s1619] %v1706
                  %v1708 = vld [vmem:[%s1626 + $0xa0] sm:%s1619]
                  %1709 = vst [vmem:[%s1627 + $0x120] sm:%s1619] %v1708
                  %v1710 = vld [vmem:[%s1626 + $0xa4] sm:%s1619]
                  %1711 = vst [vmem:[%s1627 + $0x124] sm:%s1619] %v1710
                  %v1712 = vld [vmem:[%s1626 + $0xa8] sm:%s1619]
                  %1713 = vst [vmem:[%s1627 + $0x128] sm:%s1619] %v1712
                  %v1714 = vld [vmem:[%s1626 + $0xac] sm:%s1619]
                  %1715 = vst [vmem:[%s1627 + $0x12c] sm:%s1619] %v1714
                  %v1716 = vld [vmem:[%s1626 + $0xb0] sm:%s1619]
                  %1717 = vst [vmem:[%s1627 + $0x130] sm:%s1619] %v1716
                  %v1718 = vld [vmem:[%s1626 + $0xb4] sm:%s1619]
                  %1719 = vst [vmem:[%s1627 + $0x134] sm:%s1619] %v1718
                  %v1720 = vld [vmem:[%s1626 + $0xb8] sm:%s1619]
                  %1721 = vst [vmem:[%s1627 + $0x138] sm:%s1619] %v1720
                  %v1722 = vld [vmem:[%s1626 + $0xbc] sm:%s1619]
                  %1723 = vst [vmem:[%s1627 + $0x13c] sm:%s1619] %v1722
                  %v1724 = vld [vmem:[%s1626 + $0xc0] sm:%s1619]
                  %1725 = vst [vmem:[%s1627 + $0x180] sm:%s1619] %v1724
                  %v1726 = vld [vmem:[%s1626 + $0xc4] sm:%s1619]
                  %1727 = vst [vmem:[%s1627 + $0x184] sm:%s1619] %v1726
                  %v1728 = vld [vmem:[%s1626 + $0xc8] sm:%s1619]
                  %1729 = vst [vmem:[%s1627 + $0x188] sm:%s1619] %v1728
                  %v1730 = vld [vmem:[%s1626 + $0xcc] sm:%s1619]
                  %1731 = vst [vmem:[%s1627 + $0x18c] sm:%s1619] %v1730
                  %v1732 = vld [vmem:[%s1626 + $0xd0] sm:%s1619]
                  %1733 = vst [vmem:[%s1627 + $0x190] sm:%s1619] %v1732
                  %v1734 = vld [vmem:[%s1626 + $0xd4] sm:%s1619]
                  %1735 = vst [vmem:[%s1627 + $0x194] sm:%s1619] %v1734
                  %v1736 = vld [vmem:[%s1626 + $0xd8] sm:%s1619]
                  %1737 = vst [vmem:[%s1627 + $0x198] sm:%s1619] %v1736
                  %v1738 = vld [vmem:[%s1626 + $0xdc] sm:%s1619]
                  %1739 = vst [vmem:[%s1627 + $0x19c] sm:%s1619] %v1738
                  %v1740 = vld [vmem:[%s1626 + $0xe0] sm:%s1619]
                  %1741 = vst [vmem:[%s1627 + $0x1a0] sm:%s1619] %v1740
                  %v1742 = vld [vmem:[%s1626 + $0xe4] sm:%s1619]
                  %1743 = vst [vmem:[%s1627 + $0x1a4] sm:%s1619] %v1742
                  %v1744 = vld [vmem:[%s1626 + $0xe8] sm:%s1619]
                  %1745 = vst [vmem:[%s1627 + $0x1a8] sm:%s1619] %v1744
                  %v1746 = vld [vmem:[%s1626 + $0xec] sm:%s1619]
                  %1747 = vst [vmem:[%s1627 + $0x1ac] sm:%s1619] %v1746
                  %v1748 = vld [vmem:[%s1626 + $0xf0] sm:%s1619]
                  %1749 = vst [vmem:[%s1627 + $0x1b0] sm:%s1619] %v1748
                  %v1750 = vld [vmem:[%s1626 + $0xf4] sm:%s1619]
                  %1751 = vst [vmem:[%s1627 + $0x1b4] sm:%s1619] %v1750
                  %v1752 = vld [vmem:[%s1626 + $0xf8] sm:%s1619]
                  %1753 = vst [vmem:[%s1627 + $0x1b8] sm:%s1619] %v1752
                  %v1754 = vld [vmem:[%s1626 + $0xfc] sm:%s1619]
                  %1755 = vst [vmem:[%s1627 + $0x1bc] sm:%s1619] %v1754
                $region79: #{tpu_custom_call.1} parent=66 // loop_footer
                  %s1625 = sadd.s32 1, %s1621
                $region80: #{tpu_custom_call.1} parent=66 // loop_footer_branch
                  %1620 = sbr.rel target = $region76
                $region81: #{tpu_custom_call.1} parent=66 // loop_exit
                  _
              $region67: #{tpu_custom_call.1} parent=51 // pred_fallthru
                _
            $region52: #{tpu_custom_call.1} parent=47 // pred_fallthru
              _
            // Predicated region
            $region53: #{tpu_custom_call.1} parent=47 // pred_check
              _
            $region54: #{tpu_custom_call.1} parent=47 // pred_check_branch
              %1469 = sbr.rel (0) target = $region56
            $region55: #{tpu_custom_call.1} parent=47 // pred_region
              %s1471 = ssub.s32 16, 1
              loop: start=0, step=1, limit=1
              $region57: #{tpu_custom_call.1} parent=55 // loop_pre_header
                _
              $region58: #{tpu_custom_call.1} parent=55 // loop_header
                %s1473 = sphi 0, %s1477
                %p1474 = scmp.ge.s32.totalorder %s1473, 1
                %s1478 = sphi %s1429, %s1429
                %s1479 = sphi %s1463, %s1463
              $region59: #{tpu_custom_call.1} parent=55 // loop_header_branch
                %1476 = sbr.rel (%p1474) target = $region63
              $region60: #{tpu_custom_call.1} parent=55 // loop_body
                %v1480 = vld [vmem:[%s1478] sm:%s1471]
                %1481 = vst [vmem:[%s1479] sm:%s1471] %v1480
                %v1482 = vld [vmem:[%s1478 + $0x4] sm:%s1471]
                %1483 = vst [vmem:[%s1479 + $0x4] sm:%s1471] %v1482
                %v1484 = vld [vmem:[%s1478 + $0x8] sm:%s1471]
                %1485 = vst [vmem:[%s1479 + $0x8] sm:%s1471] %v1484
                %v1486 = vld [vmem:[%s1478 + $0xc] sm:%s1471]
                %1487 = vst [vmem:[%s1479 + $0xc] sm:%s1471] %v1486
                %v1488 = vld [vmem:[%s1478 + $0x10] sm:%s1471]
                %1489 = vst [vmem:[%s1479 + $0x10] sm:%s1471] %v1488
                %v1490 = vld [vmem:[%s1478 + $0x14] sm:%s1471]
                %1491 = vst [vmem:[%s1479 + $0x14] sm:%s1471] %v1490
                %v1492 = vld [vmem:[%s1478 + $0x18] sm:%s1471]
                %1493 = vst [vmem:[%s1479 + $0x18] sm:%s1471] %v1492
                %v1494 = vld [vmem:[%s1478 + $0x1c] sm:%s1471]
                %1495 = vst [vmem:[%s1479 + $0x1c] sm:%s1471] %v1494
                %v1496 = vld [vmem:[%s1478 + $0x20] sm:%s1471]
                %1497 = vst [vmem:[%s1479 + $0x20] sm:%s1471] %v1496
                %v1498 = vld [vmem:[%s1478 + $0x24] sm:%s1471]
                %1499 = vst [vmem:[%s1479 + $0x24] sm:%s1471] %v1498
                %v1500 = vld [vmem:[%s1478 + $0x28] sm:%s1471]
                %1501 = vst [vmem:[%s1479 + $0x28] sm:%s1471] %v1500
                %v1502 = vld [vmem:[%s1478 + $0x2c] sm:%s1471]
                %1503 = vst [vmem:[%s1479 + $0x2c] sm:%s1471] %v1502
                %v1504 = vld [vmem:[%s1478 + $0x30] sm:%s1471]
                %1505 = vst [vmem:[%s1479 + $0x30] sm:%s1471] %v1504
                %v1506 = vld [vmem:[%s1478 + $0x34] sm:%s1471]
                %1507 = vst [vmem:[%s1479 + $0x34] sm:%s1471] %v1506
                %v1508 = vld [vmem:[%s1478 + $0x38] sm:%s1471]
                %1509 = vst [vmem:[%s1479 + $0x38] sm:%s1471] %v1508
                %v1510 = vld [vmem:[%s1478 + $0x3c] sm:%s1471]
                %1511 = vst [vmem:[%s1479 + $0x3c] sm:%s1471] %v1510
                %v1512 = vld [vmem:[%s1478 + $0x40] sm:%s1471]
                %1513 = vst [vmem:[%s1479 + $0x80] sm:%s1471] %v1512
                %v1514 = vld [vmem:[%s1478 + $0x44] sm:%s1471]
                %1515 = vst [vmem:[%s1479 + $0x84] sm:%s1471] %v1514
                %v1516 = vld [vmem:[%s1478 + $0x48] sm:%s1471]
                %1517 = vst [vmem:[%s1479 + $0x88] sm:%s1471] %v1516
                %v1518 = vld [vmem:[%s1478 + $0x4c] sm:%s1471]
                %1519 = vst [vmem:[%s1479 + $0x8c] sm:%s1471] %v1518
                %v1520 = vld [vmem:[%s1478 + $0x50] sm:%s1471]
                %1521 = vst [vmem:[%s1479 + $0x90] sm:%s1471] %v1520
                %v1522 = vld [vmem:[%s1478 + $0x54] sm:%s1471]
                %1523 = vst [vmem:[%s1479 + $0x94] sm:%s1471] %v1522
                %v1524 = vld [vmem:[%s1478 + $0x58] sm:%s1471]
                %1525 = vst [vmem:[%s1479 + $0x98] sm:%s1471] %v1524
                %v1526 = vld [vmem:[%s1478 + $0x5c] sm:%s1471]
                %1527 = vst [vmem:[%s1479 + $0x9c] sm:%s1471] %v1526
                %v1528 = vld [vmem:[%s1478 + $0x60] sm:%s1471]
                %1529 = vst [vmem:[%s1479 + $0xa0] sm:%s1471] %v1528
                %v1530 = vld [vmem:[%s1478 + $0x64] sm:%s1471]
                %1531 = vst [vmem:[%s1479 + $0xa4] sm:%s1471] %v1530
                %v1532 = vld [vmem:[%s1478 + $0x68] sm:%s1471]
                %1533 = vst [vmem:[%s1479 + $0xa8] sm:%s1471] %v1532
                %v1534 = vld [vmem:[%s1478 + $0x6c] sm:%s1471]
                %1535 = vst [vmem:[%s1479 + $0xac] sm:%s1471] %v1534
                %v1536 = vld [vmem:[%s1478 + $0x70] sm:%s1471]
                %1537 = vst [vmem:[%s1479 + $0xb0] sm:%s1471] %v1536
                %v1538 = vld [vmem:[%s1478 + $0x74] sm:%s1471]
                %1539 = vst [vmem:[%s1479 + $0xb4] sm:%s1471] %v1538
                %v1540 = vld [vmem:[%s1478 + $0x78] sm:%s1471]
                %1541 = vst [vmem:[%s1479 + $0xb8] sm:%s1471] %v1540
                %v1542 = vld [vmem:[%s1478 + $0x7c] sm:%s1471]
                %1543 = vst [vmem:[%s1479 + $0xbc] sm:%s1471] %v1542
                %v1544 = vld [vmem:[%s1478 + $0x80] sm:%s1471]
                %1545 = vst [vmem:[%s1479 + $0x100] sm:%s1471] %v1544
                %v1546 = vld [vmem:[%s1478 + $0x84] sm:%s1471]
                %1547 = vst [vmem:[%s1479 + $0x104] sm:%s1471] %v1546
                %v1548 = vld [vmem:[%s1478 + $0x88] sm:%s1471]
                %1549 = vst [vmem:[%s1479 + $0x108] sm:%s1471] %v1548
                %v1550 = vld [vmem:[%s1478 + $0x8c] sm:%s1471]
                %1551 = vst [vmem:[%s1479 + $0x10c] sm:%s1471] %v1550
                %v1552 = vld [vmem:[%s1478 + $0x90] sm:%s1471]
                %1553 = vst [vmem:[%s1479 + $0x110] sm:%s1471] %v1552
                %v1554 = vld [vmem:[%s1478 + $0x94] sm:%s1471]
                %1555 = vst [vmem:[%s1479 + $0x114] sm:%s1471] %v1554
                %v1556 = vld [vmem:[%s1478 + $0x98] sm:%s1471]
                %1557 = vst [vmem:[%s1479 + $0x118] sm:%s1471] %v1556
                %v1558 = vld [vmem:[%s1478 + $0x9c] sm:%s1471]
                %1559 = vst [vmem:[%s1479 + $0x11c] sm:%s1471] %v1558
                %v1560 = vld [vmem:[%s1478 + $0xa0] sm:%s1471]
                %1561 = vst [vmem:[%s1479 + $0x120] sm:%s1471] %v1560
                %v1562 = vld [vmem:[%s1478 + $0xa4] sm:%s1471]
                %1563 = vst [vmem:[%s1479 + $0x124] sm:%s1471] %v1562
                %v1564 = vld [vmem:[%s1478 + $0xa8] sm:%s1471]
                %1565 = vst [vmem:[%s1479 + $0x128] sm:%s1471] %v1564
                %v1566 = vld [vmem:[%s1478 + $0xac] sm:%s1471]
                %1567 = vst [vmem:[%s1479 + $0x12c] sm:%s1471] %v1566
                %v1568 = vld [vmem:[%s1478 + $0xb0] sm:%s1471]
                %1569 = vst [vmem:[%s1479 + $0x130] sm:%s1471] %v1568
                %v1570 = vld [vmem:[%s1478 + $0xb4] sm:%s1471]
                %1571 = vst [vmem:[%s1479 + $0x134] sm:%s1471] %v1570
                %v1572 = vld [vmem:[%s1478 + $0xb8] sm:%s1471]
                %1573 = vst [vmem:[%s1479 + $0x138] sm:%s1471] %v1572
                %v1574 = vld [vmem:[%s1478 + $0xbc] sm:%s1471]
                %1575 = vst [vmem:[%s1479 + $0x13c] sm:%s1471] %v1574
                %v1576 = vld [vmem:[%s1478 + $0xc0] sm:%s1471]
                %1577 = vst [vmem:[%s1479 + $0x180] sm:%s1471] %v1576
                %v1578 = vld [vmem:[%s1478 + $0xc4] sm:%s1471]
                %1579 = vst [vmem:[%s1479 + $0x184] sm:%s1471] %v1578
                %v1580 = vld [vmem:[%s1478 + $0xc8] sm:%s1471]
                %1581 = vst [vmem:[%s1479 + $0x188] sm:%s1471] %v1580
                %v1582 = vld [vmem:[%s1478 + $0xcc] sm:%s1471]
                %1583 = vst [vmem:[%s1479 + $0x18c] sm:%s1471] %v1582
                %v1584 = vld [vmem:[%s1478 + $0xd0] sm:%s1471]
                %1585 = vst [vmem:[%s1479 + $0x190] sm:%s1471] %v1584
                %v1586 = vld [vmem:[%s1478 + $0xd4] sm:%s1471]
                %1587 = vst [vmem:[%s1479 + $0x194] sm:%s1471] %v1586
                %v1588 = vld [vmem:[%s1478 + $0xd8] sm:%s1471]
                %1589 = vst [vmem:[%s1479 + $0x198] sm:%s1471] %v1588
                %v1590 = vld [vmem:[%s1478 + $0xdc] sm:%s1471]
                %1591 = vst [vmem:[%s1479 + $0x19c] sm:%s1471] %v1590
                %v1592 = vld [vmem:[%s1478 + $0xe0] sm:%s1471]
                %1593 = vst [vmem:[%s1479 + $0x1a0] sm:%s1471] %v1592
                %v1594 = vld [vmem:[%s1478 + $0xe4] sm:%s1471]
                %1595 = vst [vmem:[%s1479 + $0x1a4] sm:%s1471] %v1594
                %v1596 = vld [vmem:[%s1478 + $0xe8] sm:%s1471]
                %1597 = vst [vmem:[%s1479 + $0x1a8] sm:%s1471] %v1596
                %v1598 = vld [vmem:[%s1478 + $0xec] sm:%s1471]
                %1599 = vst [vmem:[%s1479 + $0x1ac] sm:%s1471] %v1598
                %v1600 = vld [vmem:[%s1478 + $0xf0] sm:%s1471]
                %1601 = vst [vmem:[%s1479 + $0x1b0] sm:%s1471] %v1600
                %v1602 = vld [vmem:[%s1478 + $0xf4] sm:%s1471]
                %1603 = vst [vmem:[%s1479 + $0x1b4] sm:%s1471] %v1602
                %v1604 = vld [vmem:[%s1478 + $0xf8] sm:%s1471]
                %1605 = vst [vmem:[%s1479 + $0x1b8] sm:%s1471] %v1604
                %v1606 = vld [vmem:[%s1478 + $0xfc] sm:%s1471]
                %1607 = vst [vmem:[%s1479 + $0x1bc] sm:%s1471] %v1606
              $region61: #{tpu_custom_call.1} parent=55 // loop_footer
                %s1477 = sadd.s32 1, %s1473
              $region62: #{tpu_custom_call.1} parent=55 // loop_footer_branch
                %1472 = sbr.rel target = $region58
              $region63: #{tpu_custom_call.1} parent=55 // loop_exit
                _
            $region56: #{tpu_custom_call.1} parent=47 // pred_fallthru
              _
          $region48: #{tpu_custom_call.1} parent=43 // pred_fallthru
            _
          %1756 = vnop
        $region44: #{tpu_custom_call.1} parent=31 // pred_fallthru
          _
        // Predicated region
        $region82: #{tpu_custom_call.1} parent=31 // pred_check
          %p1757 = pneg %p153
        $region83: #{tpu_custom_call.1} parent=31 // pred_check_branch
          %1759 = sbr.rel (%p1757) target = $region85
        $region84: #{tpu_custom_call.1} parent=31 // pred_region
          %s1760 = smul.u32 16, %s28
          %s1761 = smul.addr %s27, 64
          %s1762 = sadd.s32 %s1760, %s1761
          %s1763 = smul.addr %s1762, 4
          %s1764 = scalar_lea.vmem %s4, %s1763
          // Predicated region
          $region86: #{tpu_custom_call.1} parent=84 // pred_check
            _
          $region87: #{tpu_custom_call.1} parent=84 // pred_check_branch
            %1766 = sbr.rel (0) target = $region89
          $region88: #{tpu_custom_call.1} parent=84 // pred_region
            // Predicated region
            $region90: #{tpu_custom_call.1} parent=88 // pred_check
              _
            $region91: #{tpu_custom_call.1} parent=88 // pred_check_branch
              %1768 = sbr.rel target = $region93
            $region92: #{tpu_custom_call.1} parent=88 // pred_region
              // Predicated region
              $region105: #{tpu_custom_call.1} parent=92 // pred_check
                _
              $region106: #{tpu_custom_call.1} parent=92 // pred_check_branch
                %1846 = sbr.rel (0) target = $region108
              $region107: #{tpu_custom_call.1} parent=92 // pred_region
                loop: start=0, step=1, limit=1
                $region109: #{tpu_custom_call.1} parent=107 // loop_pre_header
                  _
                $region110: #{tpu_custom_call.1} parent=107 // loop_header
                  %s1848 = sphi 0, %s1852
                  %p1849 = scmp.ge.s32.totalorder %s1848, 1
                  %s1853 = sphi %s1433, %s1433
                  %s1854 = sphi %s1764, %s1764
                $region111: #{tpu_custom_call.1} parent=107 // loop_header_branch
                  %1851 = sbr.rel (%p1849) target = $region115
                $region112: #{tpu_custom_call.1} parent=107 // loop_body
                  _
                $region113: #{tpu_custom_call.1} parent=107 // loop_footer
                  %s1852 = sadd.s32 1, %s1848
                $region114: #{tpu_custom_call.1} parent=107 // loop_footer_branch
                  %1847 = sbr.rel target = $region110
                $region115: #{tpu_custom_call.1} parent=107 // loop_exit
                  _
                %s1856 = ssub.s32 16, 1
                loop: start=0, step=1, limit=1
                $region116: #{tpu_custom_call.1} parent=107 // loop_pre_header
                  _
                $region117: #{tpu_custom_call.1} parent=107 // loop_header
                  %s1858 = sphi 0, %s1862
                  %p1859 = scmp.ge.s32.totalorder %s1858, 1
                  %s1863 = sphi %s1433, %s1433
                  %s1864 = sphi %s1764, %s1764
                $region118: #{tpu_custom_call.1} parent=107 // loop_header_branch
                  %1861 = sbr.rel (%p1859) target = $region122
                $region119: #{tpu_custom_call.1} parent=107 // loop_body
                  %v1865 = vld [vmem:[%s1863] sm:%s1856]
                  %1866 = vst [vmem:[%s1864] sm:%s1856] %v1865
                  %v1867 = vld [vmem:[%s1863 + $0x4] sm:%s1856]
                  %1868 = vst [vmem:[%s1864 + $0x4] sm:%s1856] %v1867
                  %v1869 = vld [vmem:[%s1863 + $0x8] sm:%s1856]
                  %1870 = vst [vmem:[%s1864 + $0x8] sm:%s1856] %v1869
                  %v1871 = vld [vmem:[%s1863 + $0xc] sm:%s1856]
                  %1872 = vst [vmem:[%s1864 + $0xc] sm:%s1856] %v1871
                  %v1873 = vld [vmem:[%s1863 + $0x10] sm:%s1856]
                  %1874 = vst [vmem:[%s1864 + $0x10] sm:%s1856] %v1873
                  %v1875 = vld [vmem:[%s1863 + $0x14] sm:%s1856]
                  %1876 = vst [vmem:[%s1864 + $0x14] sm:%s1856] %v1875
                  %v1877 = vld [vmem:[%s1863 + $0x18] sm:%s1856]
                  %1878 = vst [vmem:[%s1864 + $0x18] sm:%s1856] %v1877
                  %v1879 = vld [vmem:[%s1863 + $0x1c] sm:%s1856]
                  %1880 = vst [vmem:[%s1864 + $0x1c] sm:%s1856] %v1879
                  %v1881 = vld [vmem:[%s1863 + $0x20] sm:%s1856]
                  %1882 = vst [vmem:[%s1864 + $0x20] sm:%s1856] %v1881
                  %v1883 = vld [vmem:[%s1863 + $0x24] sm:%s1856]
                  %1884 = vst [vmem:[%s1864 + $0x24] sm:%s1856] %v1883
                  %v1885 = vld [vmem:[%s1863 + $0x28] sm:%s1856]
                  %1886 = vst [vmem:[%s1864 + $0x28] sm:%s1856] %v1885
                  %v1887 = vld [vmem:[%s1863 + $0x2c] sm:%s1856]
                  %1888 = vst [vmem:[%s1864 + $0x2c] sm:%s1856] %v1887
                  %v1889 = vld [vmem:[%s1863 + $0x30] sm:%s1856]
                  %1890 = vst [vmem:[%s1864 + $0x30] sm:%s1856] %v1889
                  %v1891 = vld [vmem:[%s1863 + $0x34] sm:%s1856]
                  %1892 = vst [vmem:[%s1864 + $0x34] sm:%s1856] %v1891
                  %v1893 = vld [vmem:[%s1863 + $0x38] sm:%s1856]
                  %1894 = vst [vmem:[%s1864 + $0x38] sm:%s1856] %v1893
                  %v1895 = vld [vmem:[%s1863 + $0x3c] sm:%s1856]
                  %1896 = vst [vmem:[%s1864 + $0x3c] sm:%s1856] %v1895
                  %v1897 = vld [vmem:[%s1863 + $0x40] sm:%s1856]
                  %1898 = vst [vmem:[%s1864 + $0x80] sm:%s1856] %v1897
                  %v1899 = vld [vmem:[%s1863 + $0x44] sm:%s1856]
                  %1900 = vst [vmem:[%s1864 + $0x84] sm:%s1856] %v1899
                  %v1901 = vld [vmem:[%s1863 + $0x48] sm:%s1856]
                  %1902 = vst [vmem:[%s1864 + $0x88] sm:%s1856] %v1901
                  %v1903 = vld [vmem:[%s1863 + $0x4c] sm:%s1856]
                  %1904 = vst [vmem:[%s1864 + $0x8c] sm:%s1856] %v1903
                  %v1905 = vld [vmem:[%s1863 + $0x50] sm:%s1856]
                  %1906 = vst [vmem:[%s1864 + $0x90] sm:%s1856] %v1905
                  %v1907 = vld [vmem:[%s1863 + $0x54] sm:%s1856]
                  %1908 = vst [vmem:[%s1864 + $0x94] sm:%s1856] %v1907
                  %v1909 = vld [vmem:[%s1863 + $0x58] sm:%s1856]
                  %1910 = vst [vmem:[%s1864 + $0x98] sm:%s1856] %v1909
                  %v1911 = vld [vmem:[%s1863 + $0x5c] sm:%s1856]
                  %1912 = vst [vmem:[%s1864 + $0x9c] sm:%s1856] %v1911
                  %v1913 = vld [vmem:[%s1863 + $0x60] sm:%s1856]
                  %1914 = vst [vmem:[%s1864 + $0xa0] sm:%s1856] %v1913
                  %v1915 = vld [vmem:[%s1863 + $0x64] sm:%s1856]
                  %1916 = vst [vmem:[%s1864 + $0xa4] sm:%s1856] %v1915
                  %v1917 = vld [vmem:[%s1863 + $0x68] sm:%s1856]
                  %1918 = vst [vmem:[%s1864 + $0xa8] sm:%s1856] %v1917
                  %v1919 = vld [vmem:[%s1863 + $0x6c] sm:%s1856]
                  %1920 = vst [vmem:[%s1864 + $0xac] sm:%s1856] %v1919
                  %v1921 = vld [vmem:[%s1863 + $0x70] sm:%s1856]
                  %1922 = vst [vmem:[%s1864 + $0xb0] sm:%s1856] %v1921
                  %v1923 = vld [vmem:[%s1863 + $0x74] sm:%s1856]
                  %1924 = vst [vmem:[%s1864 + $0xb4] sm:%s1856] %v1923
                  %v1925 = vld [vmem:[%s1863 + $0x78] sm:%s1856]
                  %1926 = vst [vmem:[%s1864 + $0xb8] sm:%s1856] %v1925
                  %v1927 = vld [vmem:[%s1863 + $0x7c] sm:%s1856]
                  %1928 = vst [vmem:[%s1864 + $0xbc] sm:%s1856] %v1927
                $region120: #{tpu_custom_call.1} parent=107 // loop_footer
                  %s1862 = sadd.s32 1, %s1858
                $region121: #{tpu_custom_call.1} parent=107 // loop_footer_branch
                  %1857 = sbr.rel target = $region117
                $region122: #{tpu_custom_call.1} parent=107 // loop_exit
                  _
              $region108: #{tpu_custom_call.1} parent=92 // pred_fallthru
                _
            $region93: #{tpu_custom_call.1} parent=88 // pred_fallthru
              _
            // Predicated region
            $region94: #{tpu_custom_call.1} parent=88 // pred_check
              _
            $region95: #{tpu_custom_call.1} parent=88 // pred_check_branch
              %1770 = sbr.rel (0) target = $region97
            $region96: #{tpu_custom_call.1} parent=88 // pred_region
              %s1772 = ssub.s32 16, 1
              loop: start=0, step=1, limit=1
              $region98: #{tpu_custom_call.1} parent=96 // loop_pre_header
                _
              $region99: #{tpu_custom_call.1} parent=96 // loop_header
                %s1774 = sphi 0, %s1778
                %p1775 = scmp.ge.s32.totalorder %s1774, 1
                %s1779 = sphi %s1433, %s1433
                %s1780 = sphi %s1764, %s1764
              $region100: #{tpu_custom_call.1} parent=96 // loop_header_branch
                %1777 = sbr.rel (%p1775) target = $region104
              $region101: #{tpu_custom_call.1} parent=96 // loop_body
                %v1781 = vld [vmem:[%s1779] sm:%s1772]
                %1782 = vst [vmem:[%s1780] sm:%s1772] %v1781
                %v1783 = vld [vmem:[%s1779 + $0x4] sm:%s1772]
                %1784 = vst [vmem:[%s1780 + $0x4] sm:%s1772] %v1783
                %v1785 = vld [vmem:[%s1779 + $0x8] sm:%s1772]
                %1786 = vst [vmem:[%s1780 + $0x8] sm:%s1772] %v1785
                %v1787 = vld [vmem:[%s1779 + $0xc] sm:%s1772]
                %1788 = vst [vmem:[%s1780 + $0xc] sm:%s1772] %v1787
                %v1789 = vld [vmem:[%s1779 + $0x10] sm:%s1772]
                %1790 = vst [vmem:[%s1780 + $0x10] sm:%s1772] %v1789
                %v1791 = vld [vmem:[%s1779 + $0x14] sm:%s1772]
                %1792 = vst [vmem:[%s1780 + $0x14] sm:%s1772] %v1791
                %v1793 = vld [vmem:[%s1779 + $0x18] sm:%s1772]
                %1794 = vst [vmem:[%s1780 + $0x18] sm:%s1772] %v1793
                %v1795 = vld [vmem:[%s1779 + $0x1c] sm:%s1772]
                %1796 = vst [vmem:[%s1780 + $0x1c] sm:%s1772] %v1795
                %v1797 = vld [vmem:[%s1779 + $0x20] sm:%s1772]
                %1798 = vst [vmem:[%s1780 + $0x20] sm:%s1772] %v1797
                %v1799 = vld [vmem:[%s1779 + $0x24] sm:%s1772]
                %1800 = vst [vmem:[%s1780 + $0x24] sm:%s1772] %v1799
                %v1801 = vld [vmem:[%s1779 + $0x28] sm:%s1772]
                %1802 = vst [vmem:[%s1780 + $0x28] sm:%s1772] %v1801
                %v1803 = vld [vmem:[%s1779 + $0x2c] sm:%s1772]
                %1804 = vst [vmem:[%s1780 + $0x2c] sm:%s1772] %v1803
                %v1805 = vld [vmem:[%s1779 + $0x30] sm:%s1772]
                %1806 = vst [vmem:[%s1780 + $0x30] sm:%s1772] %v1805
                %v1807 = vld [vmem:[%s1779 + $0x34] sm:%s1772]
                %1808 = vst [vmem:[%s1780 + $0x34] sm:%s1772] %v1807
                %v1809 = vld [vmem:[%s1779 + $0x38] sm:%s1772]
                %1810 = vst [vmem:[%s1780 + $0x38] sm:%s1772] %v1809
                %v1811 = vld [vmem:[%s1779 + $0x3c] sm:%s1772]
                %1812 = vst [vmem:[%s1780 + $0x3c] sm:%s1772] %v1811
                %v1813 = vld [vmem:[%s1779 + $0x40] sm:%s1772]
                %1814 = vst [vmem:[%s1780 + $0x80] sm:%s1772] %v1813
                %v1815 = vld [vmem:[%s1779 + $0x44] sm:%s1772]
                %1816 = vst [vmem:[%s1780 + $0x84] sm:%s1772] %v1815
                %v1817 = vld [vmem:[%s1779 + $0x48] sm:%s1772]
                %1818 = vst [vmem:[%s1780 + $0x88] sm:%s1772] %v1817
                %v1819 = vld [vmem:[%s1779 + $0x4c] sm:%s1772]
                %1820 = vst [vmem:[%s1780 + $0x8c] sm:%s1772] %v1819
                %v1821 = vld [vmem:[%s1779 + $0x50] sm:%s1772]
                %1822 = vst [vmem:[%s1780 + $0x90] sm:%s1772] %v1821
                %v1823 = vld [vmem:[%s1779 + $0x54] sm:%s1772]
                %1824 = vst [vmem:[%s1780 + $0x94] sm:%s1772] %v1823
                %v1825 = vld [vmem:[%s1779 + $0x58] sm:%s1772]
                %1826 = vst [vmem:[%s1780 + $0x98] sm:%s1772] %v1825
                %v1827 = vld [vmem:[%s1779 + $0x5c] sm:%s1772]
                %1828 = vst [vmem:[%s1780 + $0x9c] sm:%s1772] %v1827
                %v1829 = vld [vmem:[%s1779 + $0x60] sm:%s1772]
                %1830 = vst [vmem:[%s1780 + $0xa0] sm:%s1772] %v1829
                %v1831 = vld [vmem:[%s1779 + $0x64] sm:%s1772]
                %1832 = vst [vmem:[%s1780 + $0xa4] sm:%s1772] %v1831
                %v1833 = vld [vmem:[%s1779 + $0x68] sm:%s1772]
                %1834 = vst [vmem:[%s1780 + $0xa8] sm:%s1772] %v1833
                %v1835 = vld [vmem:[%s1779 + $0x6c] sm:%s1772]
                %1836 = vst [vmem:[%s1780 + $0xac] sm:%s1772] %v1835
                %v1837 = vld [vmem:[%s1779 + $0x70] sm:%s1772]
                %1838 = vst [vmem:[%s1780 + $0xb0] sm:%s1772] %v1837
                %v1839 = vld [vmem:[%s1779 + $0x74] sm:%s1772]
                %1840 = vst [vmem:[%s1780 + $0xb4] sm:%s1772] %v1839
                %v1841 = vld [vmem:[%s1779 + $0x78] sm:%s1772]
                %1842 = vst [vmem:[%s1780 + $0xb8] sm:%s1772] %v1841
                %v1843 = vld [vmem:[%s1779 + $0x7c] sm:%s1772]
                %1844 = vst [vmem:[%s1780 + $0xbc] sm:%s1772] %v1843
              $region102: #{tpu_custom_call.1} parent=96 // loop_footer
                %s1778 = sadd.s32 1, %s1774
              $region103: #{tpu_custom_call.1} parent=96 // loop_footer_branch
                %1773 = sbr.rel target = $region99
              $region104: #{tpu_custom_call.1} parent=96 // loop_exit
                _
            $region97: #{tpu_custom_call.1} parent=88 // pred_fallthru
              _
          $region89: #{tpu_custom_call.1} parent=84 // pred_fallthru
            _
          %1929 = vnop
        $region85: #{tpu_custom_call.1} parent=31 // pred_fallthru
          _
        // Predicated region
        $region123: #{tpu_custom_call.1} parent=31 // pred_check
          %p1930 = pneg %p181
        $region124: #{tpu_custom_call.1} parent=31 // pred_check_branch
          %1932 = sbr.rel (%p1930) target = $region126
        $region125: #{tpu_custom_call.1} parent=31 // pred_region
          %s1933 = smul.u32 16, %s28
          %s1934 = smul.addr %s27, 64
          %s1935 = sadd.s32 %s1933, %s1934
          %s1936 = smul.addr %s1935, 4
          %s1937 = scalar_lea.vmem %s5, %s1936
          // Predicated region
          $region127: #{tpu_custom_call.1} parent=125 // pred_check
            _
          $region128: #{tpu_custom_call.1} parent=125 // pred_check_branch
            %1939 = sbr.rel (0) target = $region130
          $region129: #{tpu_custom_call.1} parent=125 // pred_region
            // Predicated region
            $region131: #{tpu_custom_call.1} parent=129 // pred_check
              _
            $region132: #{tpu_custom_call.1} parent=129 // pred_check_branch
              %1941 = sbr.rel target = $region134
            $region133: #{tpu_custom_call.1} parent=129 // pred_region
              // Predicated region
              $region146: #{tpu_custom_call.1} parent=133 // pred_check
                _
              $region147: #{tpu_custom_call.1} parent=133 // pred_check_branch
                %2019 = sbr.rel (0) target = $region149
              $region148: #{tpu_custom_call.1} parent=133 // pred_region
                loop: start=0, step=1, limit=1
                $region150: #{tpu_custom_call.1} parent=148 // loop_pre_header
                  _
                $region151: #{tpu_custom_call.1} parent=148 // loop_header
                  %s2021 = sphi 0, %s2025
                  %p2022 = scmp.ge.s32.totalorder %s2021, 1
                  %s2026 = sphi %s1437, %s1437
                  %s2027 = sphi %s1937, %s1937
                $region152: #{tpu_custom_call.1} parent=148 // loop_header_branch
                  %2024 = sbr.rel (%p2022) target = $region156
                $region153: #{tpu_custom_call.1} parent=148 // loop_body
                  _
                $region154: #{tpu_custom_call.1} parent=148 // loop_footer
                  %s2025 = sadd.s32 1, %s2021
                $region155: #{tpu_custom_call.1} parent=148 // loop_footer_branch
                  %2020 = sbr.rel target = $region151
                $region156: #{tpu_custom_call.1} parent=148 // loop_exit
                  _
                %s2029 = ssub.s32 16, 1
                loop: start=0, step=1, limit=1
                $region157: #{tpu_custom_call.1} parent=148 // loop_pre_header
                  _
                $region158: #{tpu_custom_call.1} parent=148 // loop_header
                  %s2031 = sphi 0, %s2035
                  %p2032 = scmp.ge.s32.totalorder %s2031, 1
                  %s2036 = sphi %s1437, %s1437
                  %s2037 = sphi %s1937, %s1937
                $region159: #{tpu_custom_call.1} parent=148 // loop_header_branch
                  %2034 = sbr.rel (%p2032) target = $region163
                $region160: #{tpu_custom_call.1} parent=148 // loop_body
                  %v2038 = vld [vmem:[%s2036] sm:%s2029]
                  %2039 = vst [vmem:[%s2037] sm:%s2029] %v2038
                  %v2040 = vld [vmem:[%s2036 + $0x4] sm:%s2029]
                  %2041 = vst [vmem:[%s2037 + $0x4] sm:%s2029] %v2040
                  %v2042 = vld [vmem:[%s2036 + $0x8] sm:%s2029]
                  %2043 = vst [vmem:[%s2037 + $0x8] sm:%s2029] %v2042
                  %v2044 = vld [vmem:[%s2036 + $0xc] sm:%s2029]
                  %2045 = vst [vmem:[%s2037 + $0xc] sm:%s2029] %v2044
                  %v2046 = vld [vmem:[%s2036 + $0x10] sm:%s2029]
                  %2047 = vst [vmem:[%s2037 + $0x10] sm:%s2029] %v2046
                  %v2048 = vld [vmem:[%s2036 + $0x14] sm:%s2029]
                  %2049 = vst [vmem:[%s2037 + $0x14] sm:%s2029] %v2048
                  %v2050 = vld [vmem:[%s2036 + $0x18] sm:%s2029]
                  %2051 = vst [vmem:[%s2037 + $0x18] sm:%s2029] %v2050
                  %v2052 = vld [vmem:[%s2036 + $0x1c] sm:%s2029]
                  %2053 = vst [vmem:[%s2037 + $0x1c] sm:%s2029] %v2052
                  %v2054 = vld [vmem:[%s2036 + $0x20] sm:%s2029]
                  %2055 = vst [vmem:[%s2037 + $0x20] sm:%s2029] %v2054
                  %v2056 = vld [vmem:[%s2036 + $0x24] sm:%s2029]
                  %2057 = vst [vmem:[%s2037 + $0x24] sm:%s2029] %v2056
                  %v2058 = vld [vmem:[%s2036 + $0x28] sm:%s2029]
                  %2059 = vst [vmem:[%s2037 + $0x28] sm:%s2029] %v2058
                  %v2060 = vld [vmem:[%s2036 + $0x2c] sm:%s2029]
                  %2061 = vst [vmem:[%s2037 + $0x2c] sm:%s2029] %v2060
                  %v2062 = vld [vmem:[%s2036 + $0x30] sm:%s2029]
                  %2063 = vst [vmem:[%s2037 + $0x30] sm:%s2029] %v2062
                  %v2064 = vld [vmem:[%s2036 + $0x34] sm:%s2029]
                  %2065 = vst [vmem:[%s2037 + $0x34] sm:%s2029] %v2064
                  %v2066 = vld [vmem:[%s2036 + $0x38] sm:%s2029]
                  %2067 = vst [vmem:[%s2037 + $0x38] sm:%s2029] %v2066
                  %v2068 = vld [vmem:[%s2036 + $0x3c] sm:%s2029]
                  %2069 = vst [vmem:[%s2037 + $0x3c] sm:%s2029] %v2068
                  %v2070 = vld [vmem:[%s2036 + $0x40] sm:%s2029]
                  %2071 = vst [vmem:[%s2037 + $0x80] sm:%s2029] %v2070
                  %v2072 = vld [vmem:[%s2036 + $0x44] sm:%s2029]
                  %2073 = vst [vmem:[%s2037 + $0x84] sm:%s2029] %v2072
                  %v2074 = vld [vmem:[%s2036 + $0x48] sm:%s2029]
                  %2075 = vst [vmem:[%s2037 + $0x88] sm:%s2029] %v2074
                  %v2076 = vld [vmem:[%s2036 + $0x4c] sm:%s2029]
                  %2077 = vst [vmem:[%s2037 + $0x8c] sm:%s2029] %v2076
                  %v2078 = vld [vmem:[%s2036 + $0x50] sm:%s2029]
                  %2079 = vst [vmem:[%s2037 + $0x90] sm:%s2029] %v2078
                  %v2080 = vld [vmem:[%s2036 + $0x54] sm:%s2029]
                  %2081 = vst [vmem:[%s2037 + $0x94] sm:%s2029] %v2080
                  %v2082 = vld [vmem:[%s2036 + $0x58] sm:%s2029]
                  %2083 = vst [vmem:[%s2037 + $0x98] sm:%s2029] %v2082
                  %v2084 = vld [vmem:[%s2036 + $0x5c] sm:%s2029]
                  %2085 = vst [vmem:[%s2037 + $0x9c] sm:%s2029] %v2084
                  %v2086 = vld [vmem:[%s2036 + $0x60] sm:%s2029]
                  %2087 = vst [vmem:[%s2037 + $0xa0] sm:%s2029] %v2086
                  %v2088 = vld [vmem:[%s2036 + $0x64] sm:%s2029]
                  %2089 = vst [vmem:[%s2037 + $0xa4] sm:%s2029] %v2088
                  %v2090 = vld [vmem:[%s2036 + $0x68] sm:%s2029]
                  %2091 = vst [vmem:[%s2037 + $0xa8] sm:%s2029] %v2090
                  %v2092 = vld [vmem:[%s2036 + $0x6c] sm:%s2029]
                  %2093 = vst [vmem:[%s2037 + $0xac] sm:%s2029] %v2092
                  %v2094 = vld [vmem:[%s2036 + $0x70] sm:%s2029]
                  %2095 = vst [vmem:[%s2037 + $0xb0] sm:%s2029] %v2094
                  %v2096 = vld [vmem:[%s2036 + $0x74] sm:%s2029]
                  %2097 = vst [vmem:[%s2037 + $0xb4] sm:%s2029] %v2096
                  %v2098 = vld [vmem:[%s2036 + $0x78] sm:%s2029]
                  %2099 = vst [vmem:[%s2037 + $0xb8] sm:%s2029] %v2098
                  %v2100 = vld [vmem:[%s2036 + $0x7c] sm:%s2029]
                  %2101 = vst [vmem:[%s2037 + $0xbc] sm:%s2029] %v2100
                $region161: #{tpu_custom_call.1} parent=148 // loop_footer
                  %s2035 = sadd.s32 1, %s2031
                $region162: #{tpu_custom_call.1} parent=148 // loop_footer_branch
                  %2030 = sbr.rel target = $region158
                $region163: #{tpu_custom_call.1} parent=148 // loop_exit
                  _
              $region149: #{tpu_custom_call.1} parent=133 // pred_fallthru
                _
            $region134: #{tpu_custom_call.1} parent=129 // pred_fallthru
              _
            // Predicated region
            $region135: #{tpu_custom_call.1} parent=129 // pred_check
              _
            $region136: #{tpu_custom_call.1} parent=129 // pred_check_branch
              %1943 = sbr.rel (0) target = $region138
            $region137: #{tpu_custom_call.1} parent=129 // pred_region
              %s1945 = ssub.s32 16, 1
              loop: start=0, step=1, limit=1
              $region139: #{tpu_custom_call.1} parent=137 // loop_pre_header
                _
              $region140: #{tpu_custom_call.1} parent=137 // loop_header
                %s1947 = sphi 0, %s1951
                %p1948 = scmp.ge.s32.totalorder %s1947, 1
                %s1952 = sphi %s1437, %s1437
                %s1953 = sphi %s1937, %s1937
              $region141: #{tpu_custom_call.1} parent=137 // loop_header_branch
                %1950 = sbr.rel (%p1948) target = $region145
              $region142: #{tpu_custom_call.1} parent=137 // loop_body
                %v1954 = vld [vmem:[%s1952] sm:%s1945]
                %1955 = vst [vmem:[%s1953] sm:%s1945] %v1954
                %v1956 = vld [vmem:[%s1952 + $0x4] sm:%s1945]
                %1957 = vst [vmem:[%s1953 + $0x4] sm:%s1945] %v1956
                %v1958 = vld [vmem:[%s1952 + $0x8] sm:%s1945]
                %1959 = vst [vmem:[%s1953 + $0x8] sm:%s1945] %v1958
                %v1960 = vld [vmem:[%s1952 + $0xc] sm:%s1945]
                %1961 = vst [vmem:[%s1953 + $0xc] sm:%s1945] %v1960
                %v1962 = vld [vmem:[%s1952 + $0x10] sm:%s1945]
                %1963 = vst [vmem:[%s1953 + $0x10] sm:%s1945] %v1962
                %v1964 = vld [vmem:[%s1952 + $0x14] sm:%s1945]
                %1965 = vst [vmem:[%s1953 + $0x14] sm:%s1945] %v1964
                %v1966 = vld [vmem:[%s1952 + $0x18] sm:%s1945]
                %1967 = vst [vmem:[%s1953 + $0x18] sm:%s1945] %v1966
                %v1968 = vld [vmem:[%s1952 + $0x1c] sm:%s1945]
                %1969 = vst [vmem:[%s1953 + $0x1c] sm:%s1945] %v1968
                %v1970 = vld [vmem:[%s1952 + $0x20] sm:%s1945]
                %1971 = vst [vmem:[%s1953 + $0x20] sm:%s1945] %v1970
                %v1972 = vld [vmem:[%s1952 + $0x24] sm:%s1945]
                %1973 = vst [vmem:[%s1953 + $0x24] sm:%s1945] %v1972
                %v1974 = vld [vmem:[%s1952 + $0x28] sm:%s1945]
                %1975 = vst [vmem:[%s1953 + $0x28] sm:%s1945] %v1974
                %v1976 = vld [vmem:[%s1952 + $0x2c] sm:%s1945]
                %1977 = vst [vmem:[%s1953 + $0x2c] sm:%s1945] %v1976
                %v1978 = vld [vmem:[%s1952 + $0x30] sm:%s1945]
                %1979 = vst [vmem:[%s1953 + $0x30] sm:%s1945] %v1978
                %v1980 = vld [vmem:[%s1952 + $0x34] sm:%s1945]
                %1981 = vst [vmem:[%s1953 + $0x34] sm:%s1945] %v1980
                %v1982 = vld [vmem:[%s1952 + $0x38] sm:%s1945]
                %1983 = vst [vmem:[%s1953 + $0x38] sm:%s1945] %v1982
                %v1984 = vld [vmem:[%s1952 + $0x3c] sm:%s1945]
                %1985 = vst [vmem:[%s1953 + $0x3c] sm:%s1945] %v1984
                %v1986 = vld [vmem:[%s1952 + $0x40] sm:%s1945]
                %1987 = vst [vmem:[%s1953 + $0x80] sm:%s1945] %v1986
                %v1988 = vld [vmem:[%s1952 + $0x44] sm:%s1945]
                %1989 = vst [vmem:[%s1953 + $0x84] sm:%s1945] %v1988
                %v1990 = vld [vmem:[%s1952 + $0x48] sm:%s1945]
                %1991 = vst [vmem:[%s1953 + $0x88] sm:%s1945] %v1990
                %v1992 = vld [vmem:[%s1952 + $0x4c] sm:%s1945]
                %1993 = vst [vmem:[%s1953 + $0x8c] sm:%s1945] %v1992
                %v1994 = vld [vmem:[%s1952 + $0x50] sm:%s1945]
                %1995 = vst [vmem:[%s1953 + $0x90] sm:%s1945] %v1994
                %v1996 = vld [vmem:[%s1952 + $0x54] sm:%s1945]
                %1997 = vst [vmem:[%s1953 + $0x94] sm:%s1945] %v1996
                %v1998 = vld [vmem:[%s1952 + $0x58] sm:%s1945]
                %1999 = vst [vmem:[%s1953 + $0x98] sm:%s1945] %v1998
                %v2000 = vld [vmem:[%s1952 + $0x5c] sm:%s1945]
                %2001 = vst [vmem:[%s1953 + $0x9c] sm:%s1945] %v2000
                %v2002 = vld [vmem:[%s1952 + $0x60] sm:%s1945]
                %2003 = vst [vmem:[%s1953 + $0xa0] sm:%s1945] %v2002
                %v2004 = vld [vmem:[%s1952 + $0x64] sm:%s1945]
                %2005 = vst [vmem:[%s1953 + $0xa4] sm:%s1945] %v2004
                %v2006 = vld [vmem:[%s1952 + $0x68] sm:%s1945]
                %2007 = vst [vmem:[%s1953 + $0xa8] sm:%s1945] %v2006
                %v2008 = vld [vmem:[%s1952 + $0x6c] sm:%s1945]
                %2009 = vst [vmem:[%s1953 + $0xac] sm:%s1945] %v2008
                %v2010 = vld [vmem:[%s1952 + $0x70] sm:%s1945]
                %2011 = vst [vmem:[%s1953 + $0xb0] sm:%s1945] %v2010
                %v2012 = vld [vmem:[%s1952 + $0x74] sm:%s1945]
                %2013 = vst [vmem:[%s1953 + $0xb4] sm:%s1945] %v2012
                %v2014 = vld [vmem:[%s1952 + $0x78] sm:%s1945]
                %2015 = vst [vmem:[%s1953 + $0xb8] sm:%s1945] %v2014
                %v2016 = vld [vmem:[%s1952 + $0x7c] sm:%s1945]
                %2017 = vst [vmem:[%s1953 + $0xbc] sm:%s1945] %v2016
              $region143: #{tpu_custom_call.1} parent=137 // loop_footer
                %s1951 = sadd.s32 1, %s1947
              $region144: #{tpu_custom_call.1} parent=137 // loop_footer_branch
                %1946 = sbr.rel target = $region140
              $region145: #{tpu_custom_call.1} parent=137 // loop_exit
                _
            $region138: #{tpu_custom_call.1} parent=129 // pred_fallthru
              _
          $region130: #{tpu_custom_call.1} parent=125 // pred_fallthru
            _
          %2102 = vnop
        $region126: #{tpu_custom_call.1} parent=31 // pred_fallthru
          _
        // Predicated region
        $region164: #{tpu_custom_call.1} parent=31 // pred_check
          %p2103 = pneg %p209
        $region165: #{tpu_custom_call.1} parent=31 // pred_check_branch
          %2105 = sbr.rel (%p2103) target = $region167
        $region166: #{tpu_custom_call.1} parent=31 // pred_region
          %s2106 = smul.u32 16, %s28
        $region167: #{tpu_custom_call.1} parent=31 // pred_fallthru
          _
        // Predicated region
        $region168: #{tpu_custom_call.1} parent=31 // pred_check
          %p2107 = pneg %p237
        $region169: #{tpu_custom_call.1} parent=31 // pred_check_branch
          %2109 = sbr.rel (%p2107) target = $region171
        $region170: #{tpu_custom_call.1} parent=31 // pred_region
          %s2110 = smul.u32 16, %s28
        $region171: #{tpu_custom_call.1} parent=31 // pred_fallthru
          _
      $region32: #{tpu_custom_call.1} parent=5 // pred_fallthru
        _
      %p2111 = scmp.le.s32.totalorder 2, %s18
      // Predicated region
      $region172: #{tpu_custom_call.1} parent=5 // pred_check
        %p2112 = pneg %p2111
      $region173: #{tpu_custom_call.1} parent=5 // pred_check_branch
        %2114 = sbr.rel (%p2112) target = $region175
      $region174: #{tpu_custom_call.1} parent=5 // pred_region
        %s2115 = ssub.s32 %s18, 2
        // Predicated region
        $region176: #{tpu_custom_call.1} parent=174 // pred_check
          %p2116 = pneg %p131
        $region177: #{tpu_custom_call.1} parent=174 // pred_check_branch
          %2118 = sbr.rel (%p2116) target = $region179
        $region178: #{tpu_custom_call.1} parent=174 // pred_region
          %s2119 = sand.u32 %s116, 1
          %s2120 = sand.u32 %s116, 1
          %s2121 = smul.addr %s2120, 256
          %s2122 = scalar_lea.vmem [#allocation6], %s2121
        $region179: #{tpu_custom_call.1} parent=174 // pred_fallthru
          _
        // Predicated region
        $region180: #{tpu_custom_call.1} parent=174 // pred_check
          %p2123 = pneg %p159
        $region181: #{tpu_custom_call.1} parent=174 // pred_check_branch
          %2125 = sbr.rel (%p2123) target = $region183
        $region182: #{tpu_custom_call.1} parent=174 // pred_region
          %s2126 = sand.u32 %s144, 1
          %s2127 = sand.u32 %s144, 1
          %s2128 = smul.addr %s2127, 128
          %s2129 = scalar_lea.vmem [#allocation7], %s2128
        $region183: #{tpu_custom_call.1} parent=174 // pred_fallthru
          _
        // Predicated region
        $region184: #{tpu_custom_call.1} parent=174 // pred_check
          %p2130 = pneg %p187
        $region185: #{tpu_custom_call.1} parent=174 // pred_check_branch
          %2132 = sbr.rel (%p2130) target = $region187
        $region186: #{tpu_custom_call.1} parent=174 // pred_region
          %s2133 = sand.u32 %s172, 1
          %s2134 = sand.u32 %s172, 1
          %s2135 = smul.addr %s2134, 128
          %s2136 = scalar_lea.vmem [#allocation8], %s2135
        $region187: #{tpu_custom_call.1} parent=174 // pred_fallthru
          _
        // Predicated region
        $region188: #{tpu_custom_call.1} parent=174 // pred_check
          %p2137 = pneg %p215
        $region189: #{tpu_custom_call.1} parent=174 // pred_check_branch
          %2139 = sbr.rel (%p2137) target = $region191
        $region190: #{tpu_custom_call.1} parent=174 // pred_region
          %s2140 = smul.u32 16, %s30
          %p2141 = scmp.lt.s32.totalorder %s29, 1
          %s2142 = scalar_select %p2141, %s29, 1
          %p2143 = scmp.lt.s32.totalorder %s2140, 31
          %s2144 = scalar_select %p2143, %s2140, 31
          %s2145 = smul.addr %s2142, 32
          %s2146 = sadd.s32 %s2144, %s2145
          %s2147 = smul.addr %s2146, 8
          %s2148 = scalar_lea.vmem %s6, %s2147
        $region191: #{tpu_custom_call.1} parent=174 // pred_fallthru
          _
        // Predicated region
        $region192: #{tpu_custom_call.1} parent=174 // pred_check
          %p2149 = pneg %p243
        $region193: #{tpu_custom_call.1} parent=174 // pred_check_branch
          %2151 = sbr.rel (%p2149) target = $region195
        $region194: #{tpu_custom_call.1} parent=174 // pred_region
          %s2152 = smul.u32 16, %s30
          %p2153 = scmp.lt.s32.totalorder %s29, 1
          %s2154 = scalar_select %p2153, %s29, 1
          %p2155 = scmp.lt.s32.totalorder %s2152, 31
          %s2156 = scalar_select %p2155, %s2152, 31
          %s2157 = smul.addr %s2154, 32
          %s2158 = sadd.s32 %s2156, %s2157
          %s2159 = smul.addr %s2158, 8
          %s2160 = scalar_lea.vmem %s7, %s2159
        $region195: #{tpu_custom_call.1} parent=174 // pred_fallthru
          _
      $region175: #{tpu_custom_call.1} parent=5 // pred_fallthru
        _
    $region6: #{tpu_custom_call.1} parent=1 // loop_footer
      %s22 = sadd.s32 1, %s18
    $region7: #{tpu_custom_call.1} parent=1 // loop_footer_branch
      %17 = sbr.rel target = $region3
    $region8: #{tpu_custom_call.1} parent=1 // loop_exit
      _
    %2161 = vsyncpa [#allocation3], 1
    %s2162 = scalar_lea.sflag [#allocation3], 1
    %2163 = vsyncpa %s2162, 1
    %2164 = vsyncpa [#allocation5], 1

</llo_original>
